<compile_context>
chip_gen: v7x
topology: tpu7x:2x2x1
jax: 0.10.0
libtpu: 0.0.40
codegen_flags: <defaults>
</compile_context>

<pallas_src>
import jax
import jax.numpy as jnp
from jax.experimental import pallas as pl
from jax.experimental.pallas import tpu as pltpu


def _round_up(n, m):
    return ((n + m - 1) // m) * m


def ik_nn_kernel(x_ref,
                 w1_ref, b1_ref,
                 w2_ref, b2_ref,
                 w3_ref, b3_ref,
                 w4_ref, b4_ref,
                 w5_ref, b5_ref,
                 o_ref):
    cdt = w1_ref.dtype  # compute dtype for the MXU inputs (f32 or bf16)

    h = x_ref[...].astype(cdt)
    # Hidden layers: matmul (f32 accumulate) + f32 bias + f32 tanh, then cast
    # back to the compute dtype for the next MXU pass.
    h = jnp.tanh(jnp.dot(h, w1_ref[...], preferred_element_type=jnp.float32)
                 + b1_ref[...]).astype(cdt)
    h = jnp.tanh(jnp.dot(h, w2_ref[...], preferred_element_type=jnp.float32)
                 + b2_ref[...]).astype(cdt)
    h = jnp.tanh(jnp.dot(h, w3_ref[...], preferred_element_type=jnp.float32)
                 + b3_ref[...]).astype(cdt)
    h = jnp.tanh(jnp.dot(h, w4_ref[...], preferred_element_type=jnp.float32)
                 + b4_ref[...]).astype(cdt)
    # Output layer: no tanh.
    y = jnp.dot(h, w5_ref[...], preferred_element_type=jnp.float32) + b5_ref[...]
    o_ref[...] = y.astype(o_ref.dtype)


def _pad_params(params, compute_dtype):
    """Zero-pad (in, out) weights to multiples of 128; biases stay f32, padded to out_pad."""
    padded = []
    for (w, b) in params:
        fi, fo = w.shape
        fip, fop = _round_up(fi, 128), _round_up(fo, 128)
        wp = jnp.zeros((fip, fop), compute_dtype).at[:fi, :fo].set(
            w.astype(compute_dtype))
        bp = jnp.zeros((1, fop), jnp.float32).at[:, :fo].set(
            b.astype(jnp.float32))
        padded.append((wp, bp))
    return padded


def ik_nn_forward(x, params, *, compute_dtype=jnp.float32, max_batch_tile=512):
    """x: (B, n_feature) f32.  params: list of (W, b) with W (in, out), b (1, out)."""
    B, n_feature = x.shape
    n_output = params[-1][0].shape[1]

    padded = _pad_params(params, compute_dtype)
    (w1, b1), (w2, b2), (w3, b3), (w4, b4), (w5, b5) = padded
    F_pad = w1.shape[0]
    O_pad = w5.shape[1]

    # Batch tiling: single grid step for small B, MXU-row-aligned 512-row tiles
    # (and >=2 parallel grid steps for megacore) for large B.
    bt = min(max_batch_tile, _round_up(B, 8))
    B_pad = _round_up(B, bt)

    x_pad = jnp.zeros((B_pad, F_pad), compute_dtype).at[:B, :n_feature].set(
        x.astype(compute_dtype))

    full = lambda arr: pl.BlockSpec(arr.shape, lambda i: (0, 0))

    out = pl.pallas_call(
        ik_nn_kernel,
        out_shape=jax.ShapeDtypeStruct((B_pad, O_pad), jnp.float32),
        grid_spec=pltpu.PrefetchScalarGridSpec(
            num_scalar_prefetch=0,
            grid=(B_pad // bt,),
            in_specs=[
                pl.BlockSpec((bt, F_pad), lambda i: (i, 0)),
                full(w1), full(b1),
                full(w2), full(b2),
                full(w3), full(b3),
                full(w4), full(b4),
                full(w5), full(b5),
            ],
            out_specs=pl.BlockSpec((bt, O_pad), lambda i: (i, 0)),
        ),
        compiler_params=pltpu.CompilerParams(
            dimension_semantics=("parallel",)),
    )(x_pad, w1, b1, w2, b2, w3, b3, w4, b4, w5, b5)

    # Strip batch / output padding.
    return out[:B, :n_output]


def make_params(key, n_feature, n_neuron, n_output):
    """Deterministic init mimicking torch.nn.Linear's U(-1/sqrt(fan_in), 1/sqrt(fan_in)).
    Weights are built directly as (in, out) so the kernel computes x @ W + b."""
    dims = [(n_feature, n_neuron),
            (n_neuron, 600),
            (600, 600),
            (600, n_neuron),
            (n_neuron, n_output)]
    params = []
    for (fan_in, fan_out) in dims:
        key, kw, kb = jax.random.split(key, 3)
        bound = 1.0 / (fan_in ** 0.5)
        w = jax.random.uniform(kw, (fan_in, fan_out), jnp.float32, -bound, bound)
        b = jax.random.uniform(kb, (1, fan_out), jnp.float32, -bound, bound)
        params.append((w, b))
    return params


def ik_nn_reference(x, params):
    h = x
    for (w, b) in params[:-1]:
        h = jnp.tanh(h @ w + b)
    w, b = params[-1]
    return h @ w + b


if __name__ == "__main__":
    key = jax.random.PRNGKey(0)
    n_feature, n_neuron, n_output = 8, 32, 4
    batch = 16

    kx, kp = jax.random.split(key)
    x = jax.random.normal(kx, (batch, n_feature), jnp.float32)
    params = make_params(kp, n_feature, n_neuron, n_output)

    ref = ik_nn_reference(x, params)

    # f32 compute path (default): exact match to the reference.
    out_f32 = jax.block_until_ready(ik_nn_forward(x, params))
    assert out_f32.shape == (batch, n_output)
    assert jnp.allclose(out_f32, ref, atol=1e-4, rtol=1e-4), "f32 mismatch vs reference"

    # bf16 MXU fast path (v6e/v7x): f32 accumulation, looser tolerance.
    out_bf16 = jax.block_until_ready(
        ik_nn_forward(x, params, compute_dtype=jnp.bfloat16))
    assert out_bf16.shape == (batch, n_output)
    assert jnp.allclose(out_bf16, ref, atol=5e-2, rtol=5e-2), "bf16 mismatch vs reference"

    print("KERNEL_OK")
</pallas_src>

<mosaic_0001>
module attributes {stable_mosaic.version = 11 : i64} {
  func.func @ik_nn_kernel(%arg0: i32, %arg1: memref<16x128xf32, #tpu.memory_space<vmem>>, %arg2: memref<128x128xf32, #tpu.memory_space<vmem>>, %arg3: memref<1x128xf32, #tpu.memory_space<vmem>>, %arg4: memref<128x640xf32, #tpu.memory_space<vmem>>, %arg5: memref<1x640xf32, #tpu.memory_space<vmem>>, %arg6: memref<640x640xf32, #tpu.memory_space<vmem>>, %arg7: memref<1x640xf32, #tpu.memory_space<vmem>>, %arg8: memref<640x128xf32, #tpu.memory_space<vmem>>, %arg9: memref<1x128xf32, #tpu.memory_space<vmem>>, %arg10: memref<128x128xf32, #tpu.memory_space<vmem>>, %arg11: memref<1x128xf32, #tpu.memory_space<vmem>>, %arg12: memref<16x128xf32, #tpu.memory_space<vmem>>) attributes {dimension_semantics = [#tpu.dimension_semantics<parallel>], iteration_bounds = array<i64: 1>, scalar_prefetch = 0 : i64, scratch_operands = 0 : i64, tpu.core_type = #tpu.core_type<tc>, window_params = [{transform_indices = @transform_0, window_bounds = array<i64: 16, 128>}, {pipeline_mode = #tpu.pipeline_mode<synchronous>, transform_indices = @transform_1, window_bounds = array<i64: 128, 128>}, {pipeline_mode = #tpu.pipeline_mode<synchronous>, transform_indices = @transform_2, window_bounds = array<i64: 1, 128>}, {pipeline_mode = #tpu.pipeline_mode<synchronous>, transform_indices = @transform_3, window_bounds = array<i64: 128, 640>}, {pipeline_mode = #tpu.pipeline_mode<synchronous>, transform_indices = @transform_4, window_bounds = array<i64: 1, 640>}, {pipeline_mode = #tpu.pipeline_mode<synchronous>, transform_indices = @transform_5, window_bounds = array<i64: 640, 640>}, {pipeline_mode = #tpu.pipeline_mode<synchronous>, transform_indices = @transform_6, window_bounds = array<i64: 1, 640>}, {pipeline_mode = #tpu.pipeline_mode<synchronous>, transform_indices = @transform_7, window_bounds = array<i64: 640, 128>}, {pipeline_mode = #tpu.pipeline_mode<synchronous>, transform_indices = @transform_8, window_bounds = array<i64: 1, 128>}, {pipeline_mode = #tpu.pipeline_mode<synchronous>, transform_indices = @transform_9, window_bounds = array<i64: 128, 128>}, {pipeline_mode = #tpu.pipeline_mode<synchronous>, transform_indices = @transform_10, window_bounds = array<i64: 1, 128>}, {transform_indices = @transform_11, window_bounds = array<i64: 16, 128>}]} {
    %c0 = arith.constant 0 : index
    %c0_0 = arith.constant 0 : index
    %0 = vector.load %arg1[%c0, %c0_0] : memref<16x128xf32, #tpu.memory_space<vmem>>, vector<16x128xf32>
    %c0_1 = arith.constant 0 : index
    %c0_2 = arith.constant 0 : index
    %1 = vector.load %arg2[%c0_1, %c0_2] : memref<128x128xf32, #tpu.memory_space<vmem>>, vector<128x128xf32>
    %cst = arith.constant dense<0.000000e+00> : vector<16x128xf32>
    %2 = tpu.matmul %0, %1, %cst {dimension_numbers = #tpu.dot_dimension_numbers<[1], [0], [0], [1], [0, 0, 1, 1], [], []>} : vector<16x128xf32>, vector<128x128xf32>, vector<16x128xf32> -> vector<16x128xf32>
    %c0_3 = arith.constant 0 : index
    %c0_4 = arith.constant 0 : index
    %3 = vector.load %arg3[%c0_3, %c0_4] : memref<1x128xf32, #tpu.memory_space<vmem>>, vector<1x128xf32>
    %4 = vector.broadcast %3 : vector<1x128xf32> to vector<16x128xf32>
    %5 = arith.addf %2, %4 : vector<16x128xf32>
    %6 = math.tanh %5 : vector<16x128xf32>
    %c0_5 = arith.constant 0 : index
    %c0_6 = arith.constant 0 : index
    %7 = vector.load %arg4[%c0_5, %c0_6] : memref<128x640xf32, #tpu.memory_space<vmem>>, vector<128x640xf32>
    %cst_7 = arith.constant dense<0.000000e+00> : vector<16x640xf32>
    %8 = tpu.matmul %6, %7, %cst_7 {dimension_numbers = #tpu.dot_dimension_numbers<[1], [0], [0], [1], [0, 0, 1, 1], [], []>} : vector<16x128xf32>, vector<128x640xf32>, vector<16x640xf32> -> vector<16x640xf32>
    %c0_8 = arith.constant 0 : index
    %c0_9 = arith.constant 0 : index
    %9 = vector.load %arg5[%c0_8, %c0_9] : memref<1x640xf32, #tpu.memory_space<vmem>>, vector<1x640xf32>
    %10 = vector.broadcast %9 : vector<1x640xf32> to vector<16x640xf32>
    %11 = arith.addf %8, %10 : vector<16x640xf32>
    %12 = math.tanh %11 : vector<16x640xf32>
    %c0_10 = arith.constant 0 : index
    %c0_11 = arith.constant 0 : index
    %13 = vector.load %arg6[%c0_10, %c0_11] : memref<640x640xf32, #tpu.memory_space<vmem>>, vector<640x640xf32>
    %cst_12 = arith.constant dense<0.000000e+00> : vector<16x640xf32>
    %14 = tpu.matmul %12, %13, %cst_12 {dimension_numbers = #tpu.dot_dimension_numbers<[1], [0], [0], [1], [0, 0, 1, 1], [], []>} : vector<16x640xf32>, vector<640x640xf32>, vector<16x640xf32> -> vector<16x640xf32>
    %c0_13 = arith.constant 0 : index
    %c0_14 = arith.constant 0 : index
    %15 = vector.load %arg7[%c0_13, %c0_14] : memref<1x640xf32, #tpu.memory_space<vmem>>, vector<1x640xf32>
    %16 = vector.broadcast %15 : vector<1x640xf32> to vector<16x640xf32>
    %17 = arith.addf %14, %16 : vector<16x640xf32>
    %18 = math.tanh %17 : vector<16x640xf32>
    %c0_15 = arith.constant 0 : index
    %c0_16 = arith.constant 0 : index
    %19 = vector.load %arg8[%c0_15, %c0_16] : memref<640x128xf32, #tpu.memory_space<vmem>>, vector<640x128xf32>
    %cst_17 = arith.constant dense<0.000000e+00> : vector<16x128xf32>
    %20 = tpu.matmul %18, %19, %cst_17 {dimension_numbers = #tpu.dot_dimension_numbers<[1], [0], [0], [1], [0, 0, 1, 1], [], []>} : vector<16x640xf32>, vector<640x128xf32>, vector<16x128xf32> -> vector<16x128xf32>
    %c0_18 = arith.constant 0 : index
    %c0_19 = arith.constant 0 : index
    %21 = vector.load %arg9[%c0_18, %c0_19] : memref<1x128xf32, #tpu.memory_space<vmem>>, vector<1x128xf32>
    %22 = vector.broadcast %21 : vector<1x128xf32> to vector<16x128xf32>
    %23 = arith.addf %20, %22 : vector<16x128xf32>
    %24 = math.tanh %23 : vector<16x128xf32>
    %c0_20 = arith.constant 0 : index
    %c0_21 = arith.constant 0 : index
    %25 = vector.load %arg10[%c0_20, %c0_21] : memref<128x128xf32, #tpu.memory_space<vmem>>, vector<128x128xf32>
    %cst_22 = arith.constant dense<0.000000e+00> : vector<16x128xf32>
    %26 = tpu.matmul %24, %25, %cst_22 {dimension_numbers = #tpu.dot_dimension_numbers<[1], [0], [0], [1], [0, 0, 1, 1], [], []>} : vector<16x128xf32>, vector<128x128xf32>, vector<16x128xf32> -> vector<16x128xf32>
    %c0_23 = arith.constant 0 : index
    %c0_24 = arith.constant 0 : index
    %27 = vector.load %arg11[%c0_23, %c0_24] : memref<1x128xf32, #tpu.memory_space<vmem>>, vector<1x128xf32>
    %28 = vector.broadcast %27 : vector<1x128xf32> to vector<16x128xf32>
    %29 = arith.addf %26, %28 : vector<16x128xf32>
    %c0_25 = arith.constant 0 : index
    %c0_26 = arith.constant 0 : index
    %30 = vector.load %arg12[%c0_25, %c0_26] : memref<16x128xf32, #tpu.memory_space<vmem>>, vector<16x128xf32>
    tpu.vector_store %arg12[%c0_25, %c0_26], %29 {strides = array<i32>} : memref<16x128xf32, #tpu.memory_space<vmem>>, vector<16x128xf32>,
    return
  }
  func.func @transform_0(%arg0: i32) -> (i32, i32) {
    %c0_i32 = arith.constant 0 : i32
    %c0_i32_0 = arith.constant 0 : i32
    return %arg0, %c0_i32 : i32, i32
  }
  func.func @transform_1(%arg0: i32) -> (i32, i32) {
    %c0_i32 = arith.constant 0 : i32
    %c0_i32_0 = arith.constant 0 : i32
    %c0_i32_1 = arith.constant 0 : i32
    return %c0_i32, %c0_i32_0 : i32, i32
  }
  func.func @transform_2(%arg0: i32) -> (i32, i32) {
    %c0_i32 = arith.constant 0 : i32
    %c0_i32_0 = arith.constant 0 : i32
    %c0_i32_1 = arith.constant 0 : i32
    return %c0_i32, %c0_i32_0 : i32, i32
  }
  func.func @transform_3(%arg0: i32) -> (i32, i32) {
    %c0_i32 = arith.constant 0 : i32
    %c0_i32_0 = arith.constant 0 : i32
    %c0_i32_1 = arith.constant 0 : i32
    return %c0_i32, %c0_i32_0 : i32, i32
  }
  func.func @transform_4(%arg0: i32) -> (i32, i32) {
    %c0_i32 = arith.constant 0 : i32
    %c0_i32_0 = arith.constant 0 : i32
    %c0_i32_1 = arith.constant 0 : i32
    return %c0_i32, %c0_i32_0 : i32, i32
  }
  func.func @transform_5(%arg0: i32) -> (i32, i32) {
    %c0_i32 = arith.constant 0 : i32
    %c0_i32_0 = arith.constant 0 : i32
    %c0_i32_1 = arith.constant 0 : i32
    return %c0_i32, %c0_i32_0 : i32, i32
  }
  func.func @transform_6(%arg0: i32) -> (i32, i32) {
    %c0_i32 = arith.constant 0 : i32
    %c0_i32_0 = arith.constant 0 : i32
    %c0_i32_1 = arith.constant 0 : i32
    return %c0_i32, %c0_i32_0 : i32, i32
  }
  func.func @transform_7(%arg0: i32) -> (i32, i32) {
    %c0_i32 = arith.constant 0 : i32
    %c0_i32_0 = arith.constant 0 : i32
    %c0_i32_1 = arith.constant 0 : i32
    return %c0_i32, %c0_i32_0 : i32, i32
  }
  func.func @transform_8(%arg0: i32) -> (i32, i32) {
    %c0_i32 = arith.constant 0 : i32
    %c0_i32_0 = arith.constant 0 : i32
    %c0_i32_1 = arith.constant 0 : i32
    return %c0_i32, %c0_i32_0 : i32, i32
  }
  func.func @transform_9(%arg0: i32) -> (i32, i32) {
    %c0_i32 = arith.constant 0 : i32
    %c0_i32_0 = arith.constant 0 : i32
    %c0_i32_1 = arith.constant 0 : i32
    return %c0_i32, %c0_i32_0 : i32, i32
  }
  func.func @transform_10(%arg0: i32) -> (i32, i32) {
    %c0_i32 = arith.constant 0 : i32
    %c0_i32_0 = arith.constant 0 : i32
    %c0_i32_1 = arith.constant 0 : i32
    return %c0_i32, %c0_i32_0 : i32, i32
  }
  func.func @transform_11(%arg0: i32) -> (i32, i32) {
    %c0_i32 = arith.constant 0 : i32
    %c0_i32_0 = arith.constant 0 : i32
    return %arg0, %c0_i32 : i32, i32
  }
}

</mosaic_0001>

<llo_original>
// kernel: tpu_custom_call.1
$region0: #{tpu_custom_call.1}
  #allocation0 [shape = 'u32[]', space=smem, size = 0x4, offset = 0x4, fixed_abs, tag = 'smem constant byte address 0x4 - core index']
  #allocation1 [shape = 'u32[144,128]{1,0:T(1,128)}', space=vmem, size = 0x12000, scoped, tag = 'internal scratch']
  %s0 = inlined_call_operand.hbm [shape: f32[16,128], index: 0, kind: input, shape index: {}]
  %s1 = inlined_call_operand.hbm [shape: f32[128,128], index: 1, kind: input, shape index: {}]
  %s2 = inlined_call_operand.hbm [shape: f32[1,128], index: 2, kind: input, shape index: {}]
  %s3 = inlined_call_operand.hbm [shape: f32[128,640], index: 3, kind: input, shape index: {}]
  %s4 = inlined_call_operand.hbm [shape: f32[1,640], index: 4, kind: input, shape index: {}]
  %s5 = inlined_call_operand.hbm [shape: f32[640,640], index: 5, kind: input, shape index: {}]
  %s6 = inlined_call_operand.hbm [shape: f32[1,640], index: 6, kind: input, shape index: {}]
  %s7 = inlined_call_operand.hbm [shape: f32[640,128], index: 7, kind: input, shape index: {}]
  %s8 = inlined_call_operand.hbm [shape: f32[1,128], index: 8, kind: input, shape index: {}]
  %s9 = inlined_call_operand.hbm [shape: f32[128,128], index: 9, kind: input, shape index: {}]
  %s10 = inlined_call_operand.hbm [shape: f32[1,128], index: 10, kind: input, shape index: {}]
  %s11 = inlined_call_operand.hbm [shape: f32[16,128], index: 11, kind: output, shape index: {}]
  %s12 = sld [smem:[#allocation0]]
  $region98: #{tpu_custom_call.1} parent=0
    _
  %s14 = ssub.s32 1, %s12
  %s15 = scalar_select 0, %s14, %s12
  $region1: #{tpu_custom_call.1} parent=0
    #allocation2 [shape = 'u8[8192]{0}', space=vmem, size = 0x2000, scoped, tag = 'input window, operand 0, single buffered']
    #allocation3 [shape = 's32[1]{0}', space=sflag, size = 0x4, scoped, tag = 'scoped memory for tpu_custom_call.1']
    #allocation4 [shape = 's32[1]{0}', space=sflag, size = 0x4, scoped, tag = 'scoped memory for tpu_custom_call.1']
    #allocation5 [shape = 'u8[65536]{0}', space=vmem, size = 0x10000, scoped, tag = 'input window, operand 1, single buffered']
    #allocation6 [shape = 's32[1]{0}', space=sflag, size = 0x4, scoped, tag = 'scoped memory for tpu_custom_call.1']
    #allocation7 [shape = 'u8[512]{0}', space=vmem, size = 0x400, scoped, tag = 'input window, operand 2, single buffered']
    #allocation8 [shape = 'u8[327680]{0}', space=vmem, size = 0x50000, scoped, tag = 'input window, operand 3, single buffered']
    #allocation9 [shape = 's32[1]{0}', space=sflag, size = 0x4, scoped, tag = 'scoped memory for tpu_custom_call.1']
    #allocation10 [shape = 'u8[2560]{0}', space=vmem, size = 0xc00, scoped, tag = 'input window, operand 4, single buffered']
    #allocation11 [shape = 'u8[1638400]{0}', space=vmem, size = 0x190000, scoped, tag = 'input window, operand 5, single buffered']
    #allocation12 [shape = 's32[1]{0}', space=sflag, size = 0x4, scoped, tag = 'scoped memory for tpu_custom_call.1']
    #allocation13 [shape = 'u8[2560]{0}', space=vmem, size = 0xc00, scoped, tag = 'input window, operand 6, single buffered']
    #allocation14 [shape = 'u8[327680]{0}', space=vmem, size = 0x50000, scoped, tag = 'input window, operand 7, single buffered']
    #allocation15 [shape = 's32[1]{0}', space=sflag, size = 0x4, scoped, tag = 'scoped memory for tpu_custom_call.1']
    #allocation16 [shape = 'u8[512]{0}', space=vmem, size = 0x400, scoped, tag = 'input window, operand 8, single buffered']
    #allocation17 [shape = 'u8[65536]{0}', space=vmem, size = 0x10000, scoped, tag = 'input window, operand 9, single buffered']
    #allocation18 [shape = 's32[1]{0}', space=sflag, size = 0x4, scoped, tag = 'scoped memory for tpu_custom_call.1']
    #allocation19 [shape = 'u8[512]{0}', space=vmem, size = 0x400, scoped, tag = 'input window, operand 10, single buffered']
    #allocation20 [shape = 'u8[8192]{0}', space=vmem, size = 0x2000, scoped, tag = 'output window, operand 0, single buffered']
    %16 = vsyncpa [#allocation3], 0
    %17 = vsyncpa [#allocation6], 0
    %18 = vsyncpa [#allocation9], 0
    %19 = vsyncpa [#allocation12], 0
    %20 = vsyncpa [#allocation15], 0
    %21 = vsyncpa [#allocation18], 0
    %22 = vsyncpa [#allocation4], 0
    // Predicated region
    $region2: #{tpu_custom_call.1} parent=1 // pred_check
      _
    $region3: #{tpu_custom_call.1} parent=1 // pred_check_branch
      %24 = sbr.rel (0) target = $region5
    $region4: #{tpu_custom_call.1} parent=1 // pred_region
      %s26 = ssub.s32 256, 256
      %27 = vsyncadd [#allocation3], %s26
      %s28 = sshll.u32 [#allocation2], 4
      %s29 = int_to_ptr.vmem [resolvable:$true] %s28
      %34 = dma.hbm_to_vmem [thread:$0]  %s0, 256, %s29, [#allocation3], 128, 128, 8
    $region5: #{tpu_custom_call.1} parent=1 // pred_fallthru
      _
    // Predicated region
    $region6: #{tpu_custom_call.1} parent=1 // pred_check
      _
    $region7: #{tpu_custom_call.1} parent=1 // pred_check_branch
      %36 = sbr.rel (0) target = $region9
    $region8: #{tpu_custom_call.1} parent=1 // pred_region
      %s38 = ssub.s32 2048, 2048
      %39 = vsyncadd [#allocation6], %s38
      %s40 = sshll.u32 [#allocation5], 4
      %s41 = int_to_ptr.vmem [resolvable:$true] %s40
      %46 = dma.hbm_to_vmem [thread:$0]  %s1, 2048, %s41, [#allocation6], 128, 128, 8
    $region9: #{tpu_custom_call.1} parent=1 // pred_fallthru
      _
    // Predicated region
    $region10: #{tpu_custom_call.1} parent=1 // pred_check
      _
    $region11: #{tpu_custom_call.1} parent=1 // pred_check_branch
      %48 = sbr.rel (0) target = $region13
    $region12: #{tpu_custom_call.1} parent=1 // pred_region
      %s50 = ssub.s32 16, 16
      %51 = vsyncadd [#allocation6], %s50
      %s53 = sshll.u32 [#allocation7], 4
      %s54 = int_to_ptr.vmem [resolvable:$true] %s53
      %56 = dma.hbm_to_vmem [thread:$0]  %s2, 16, %s54, [#allocation6]
    $region13: #{tpu_custom_call.1} parent=1 // pred_fallthru
      _
    // Predicated region
    $region14: #{tpu_custom_call.1} parent=1 // pred_check
      _
    $region15: #{tpu_custom_call.1} parent=1 // pred_check_branch
      %58 = sbr.rel (0) target = $region17
    $region16: #{tpu_custom_call.1} parent=1 // pred_region
      %s60 = ssub.s32 10240, 10240
      %61 = vsyncadd [#allocation9], %s60
      %s62 = sshll.u32 [#allocation8], 4
      %s63 = int_to_ptr.vmem [resolvable:$true] %s62
      %68 = dma.hbm_to_vmem [thread:$0]  %s3, 10240, %s63, [#allocation9], 640, 640, 40
    $region17: #{tpu_custom_call.1} parent=1 // pred_fallthru
      _
    // Predicated region
    $region18: #{tpu_custom_call.1} parent=1 // pred_check
      _
    $region19: #{tpu_custom_call.1} parent=1 // pred_check_branch
      %70 = sbr.rel (0) target = $region21
    $region20: #{tpu_custom_call.1} parent=1 // pred_region
      %s72 = ssub.s32 80, 80
      %73 = vsyncadd [#allocation9], %s72
      %s75 = sshll.u32 [#allocation10], 4
      %s76 = int_to_ptr.vmem [resolvable:$true] %s75
      %78 = dma.hbm_to_vmem [thread:$0]  %s4, 80, %s76, [#allocation9]
    $region21: #{tpu_custom_call.1} parent=1 // pred_fallthru
      _
    // Predicated region
    $region22: #{tpu_custom_call.1} parent=1 // pred_check
      _
    $region23: #{tpu_custom_call.1} parent=1 // pred_check_branch
      %80 = sbr.rel (0) target = $region25
    $region24: #{tpu_custom_call.1} parent=1 // pred_region
      %s82 = ssub.s32 51200, 51200
      %83 = vsyncadd [#allocation12], %s82
      %s84 = sshll.u32 [#allocation11], 4
      %s85 = int_to_ptr.vmem [resolvable:$true] %s84
      %90 = dma.hbm_to_vmem [thread:$0]  %s5, 51200, %s85, [#allocation12], 640, 640, 40
    $region25: #{tpu_custom_call.1} parent=1 // pred_fallthru
      _
    // Predicated region
    $region26: #{tpu_custom_call.1} parent=1 // pred_check
      _
    $region27: #{tpu_custom_call.1} parent=1 // pred_check_branch
      %92 = sbr.rel (0) target = $region29
    $region28: #{tpu_custom_call.1} parent=1 // pred_region
      %s94 = ssub.s32 80, 80
      %95 = vsyncadd [#allocation12], %s94
      %s97 = sshll.u32 [#allocation13], 4
      %s98 = int_to_ptr.vmem [resolvable:$true] %s97
      %100 = dma.hbm_to_vmem [thread:$0]  %s6, 80, %s98, [#allocation12]
    $region29: #{tpu_custom_call.1} parent=1 // pred_fallthru
      _
    // Predicated region
    $region30: #{tpu_custom_call.1} parent=1 // pred_check
      _
    $region31: #{tpu_custom_call.1} parent=1 // pred_check_branch
      %102 = sbr.rel (0) target = $region33
    $region32: #{tpu_custom_call.1} parent=1 // pred_region
      %s104 = ssub.s32 10240, 10240
      %105 = vsyncadd [#allocation15], %s104
      %s106 = sshll.u32 [#allocation14], 4
      %s107 = int_to_ptr.vmem [resolvable:$true] %s106
      %112 = dma.hbm_to_vmem [thread:$0]  %s7, 10240, %s107, [#allocation15], 128, 128, 8
    $region33: #{tpu_custom_call.1} parent=1 // pred_fallthru
      _
    // Predicated region
    $region34: #{tpu_custom_call.1} parent=1 // pred_check
      _
    $region35: #{tpu_custom_call.1} parent=1 // pred_check_branch
      %114 = sbr.rel (0) target = $region37
    $region36: #{tpu_custom_call.1} parent=1 // pred_region
      %s116 = ssub.s32 16, 16
      %117 = vsyncadd [#allocation15], %s116
      %s119 = sshll.u32 [#allocation16], 4
      %s120 = int_to_ptr.vmem [resolvable:$true] %s119
      %122 = dma.hbm_to_vmem [thread:$0]  %s8, 16, %s120, [#allocation15]
    $region37: #{tpu_custom_call.1} parent=1 // pred_fallthru
      _
    // Predicated region
    $region38: #{tpu_custom_call.1} parent=1 // pred_check
      _
    $region39: #{tpu_custom_call.1} parent=1 // pred_check_branch
      %124 = sbr.rel (0) target = $region41
    $region40: #{tpu_custom_call.1} parent=1 // pred_region
      %s126 = ssub.s32 2048, 2048
      %127 = vsyncadd [#allocation18], %s126
      %s128 = sshll.u32 [#allocation17], 4
      %s129 = int_to_ptr.vmem [resolvable:$true] %s128
      %134 = dma.hbm_to_vmem [thread:$0]  %s9, 2048, %s129, [#allocation18], 128, 128, 8
    $region41: #{tpu_custom_call.1} parent=1 // pred_fallthru
      _
    // Predicated region
    $region42: #{tpu_custom_call.1} parent=1 // pred_check
      _
    $region43: #{tpu_custom_call.1} parent=1 // pred_check_branch
      %136 = sbr.rel (0) target = $region45
    $region44: #{tpu_custom_call.1} parent=1 // pred_region
      %s138 = ssub.s32 16, 16
      %139 = vsyncadd [#allocation18], %s138
      %s141 = sshll.u32 [#allocation19], 4
      %s142 = int_to_ptr.vmem [resolvable:$true] %s141
      %144 = dma.hbm_to_vmem [thread:$0]  %s10, 16, %s142, [#allocation18]
    $region45: #{tpu_custom_call.1} parent=1 // pred_fallthru
      _
    // Predicated region
    $region46: #{tpu_custom_call.1} parent=1 // pred_check
      _
    $region47: #{tpu_custom_call.1} parent=1 // pred_check_branch
      %146 = sbr.rel (0) target = $region49
    $region48: #{tpu_custom_call.1} parent=1 // pred_region
      %147 = dma.done [#allocation3], 256
    $region49: #{tpu_custom_call.1} parent=1 // pred_fallthru
      _
    // Predicated region
    $region50: #{tpu_custom_call.1} parent=1 // pred_check
      _
    $region51: #{tpu_custom_call.1} parent=1 // pred_check_branch
      %149 = sbr.rel (0) target = $region53
    $region52: #{tpu_custom_call.1} parent=1 // pred_region
      %150 = dma.done [#allocation6], 2048
    $region53: #{tpu_custom_call.1} parent=1 // pred_fallthru
      _
    // Predicated region
    $region54: #{tpu_custom_call.1} parent=1 // pred_check
      _
    $region55: #{tpu_custom_call.1} parent=1 // pred_check_branch
      %152 = sbr.rel (0) target = $region57
    $region56: #{tpu_custom_call.1} parent=1 // pred_region
      %153 = dma.done [#allocation6], 16
    $region57: #{tpu_custom_call.1} parent=1 // pred_fallthru
      _
    // Predicated region
    $region58: #{tpu_custom_call.1} parent=1 // pred_check
      _
    $region59: #{tpu_custom_call.1} parent=1 // pred_check_branch
      %155 = sbr.rel (0) target = $region61
    $region60: #{tpu_custom_call.1} parent=1 // pred_region
      %156 = dma.done [#allocation9], 10240
    $region61: #{tpu_custom_call.1} parent=1 // pred_fallthru
      _
    // Predicated region
    $region62: #{tpu_custom_call.1} parent=1 // pred_check
      _
    $region63: #{tpu_custom_call.1} parent=1 // pred_check_branch
      %158 = sbr.rel (0) target = $region65
    $region64: #{tpu_custom_call.1} parent=1 // pred_region
      %159 = dma.done [#allocation9], 80
    $region65: #{tpu_custom_call.1} parent=1 // pred_fallthru
      _
    // Predicated region
    $region66: #{tpu_custom_call.1} parent=1 // pred_check
      _
    $region67: #{tpu_custom_call.1} parent=1 // pred_check_branch
      %161 = sbr.rel (0) target = $region69
    $region68: #{tpu_custom_call.1} parent=1 // pred_region
      %162 = dma.done [#allocation12], 51200
    $region69: #{tpu_custom_call.1} parent=1 // pred_fallthru
      _
    // Predicated region
    $region70: #{tpu_custom_call.1} parent=1 // pred_check
      _
    $region71: #{tpu_custom_call.1} parent=1 // pred_check_branch
      %164 = sbr.rel (0) target = $region73
    $region72: #{tpu_custom_call.1} parent=1 // pred_region
      %165 = dma.done [#allocation12], 80
    $region73: #{tpu_custom_call.1} parent=1 // pred_fallthru
      _
    // Predicated region
    $region74: #{tpu_custom_call.1} parent=1 // pred_check
      _
    $region75: #{tpu_custom_call.1} parent=1 // pred_check_branch
      %167 = sbr.rel (0) target = $region77
    $region76: #{tpu_custom_call.1} parent=1 // pred_region
      %168 = dma.done [#allocation15], 10240
    $region77: #{tpu_custom_call.1} parent=1 // pred_fallthru
      _
    // Predicated region
    $region78: #{tpu_custom_call.1} parent=1 // pred_check
      _
    $region79: #{tpu_custom_call.1} parent=1 // pred_check_branch
      %170 = sbr.rel (0) target = $region81
    $region80: #{tpu_custom_call.1} parent=1 // pred_region
      %171 = dma.done [#allocation15], 16
    $region81: #{tpu_custom_call.1} parent=1 // pred_fallthru
      _
    // Predicated region
    $region82: #{tpu_custom_call.1} parent=1 // pred_check
      _
    $region83: #{tpu_custom_call.1} parent=1 // pred_check_branch
      %173 = sbr.rel (0) target = $region85
    $region84: #{tpu_custom_call.1} parent=1 // pred_region
      %174 = dma.done [#allocation18], 2048
    $region85: #{tpu_custom_call.1} parent=1 // pred_fallthru
      _
    // Predicated region
    $region86: #{tpu_custom_call.1} parent=1 // pred_check
      _
    $region87: #{tpu_custom_call.1} parent=1 // pred_check_branch
      %176 = sbr.rel (0) target = $region89
    $region88: #{tpu_custom_call.1} parent=1 // pred_region
      %177 = dma.done [#allocation18], 16
    $region89: #{tpu_custom_call.1} parent=1 // pred_fallthru
      _
    %v178 = vld [vmem:[#allocation2] sm:$0xff]
    %v179 = vld [vmem:[#allocation2 + $0x8] sm:$0xff]
    %v180 = vld [vmem:[#allocation5] sm:$0xff]
    %v181 = vld [vmem:[#allocation5 + $0x8] sm:$0xff]
    %v182 = vld [vmem:[#allocation5 + $0x10] sm:$0xff]
    %v183 = vld [vmem:[#allocation5 + $0x18] sm:$0xff]
    %v184 = vld [vmem:[#allocation5 + $0x20] sm:$0xff]
    %v185 = vld [vmem:[#allocation5 + $0x28] sm:$0xff]
    %v186 = vld [vmem:[#allocation5 + $0x30] sm:$0xff]
    %v187 = vld [vmem:[#allocation5 + $0x38] sm:$0xff]
    %v188 = vld [vmem:[#allocation5 + $0x40] sm:$0xff]
    %v189 = vld [vmem:[#allocation5 + $0x48] sm:$0xff]
    %v190 = vld [vmem:[#allocation5 + $0x50] sm:$0xff]
    %v191 = vld [vmem:[#allocation5 + $0x58] sm:$0xff]
    %v192 = vld [vmem:[#allocation5 + $0x60] sm:$0xff]
    %v193 = vld [vmem:[#allocation5 + $0x68] sm:$0xff]
    %v194 = vld [vmem:[#allocation5 + $0x70] sm:$0xff]
    %v195 = vld [vmem:[#allocation5 + $0x78] sm:$0xff]
    %v196 = vld [vmem:[#allocation7] sm:$0x1]
    %v198 = vlaneseq
    %v199 = vshrl.u32 %v198, 7
    %v200 = vsub.s32 0, %v199
    %v201 = vrot.slane %v196, %v200
    %203 = vmatprep.subr.mxu0 0.0
    %204 = vmatpush1.msra.mxu0 %v180
    %205 = vmatprep.subr.mxu0 0.0
    %206 = vmatpush1.msra.mxu0 %v181
    %207 = vmatprep.subr.mxu0 0.0
    %208 = vmatpush1.msra.mxu0 %v182
    %209 = vmatprep.subr.mxu0 0.0
    %210 = vmatpush1.msra.mxu0 %v183
    %211 = vmatprep.subr.mxu0 0.0
    %212 = vmatpush1.msra.mxu0 %v184
    %213 = vmatprep.subr.mxu0 0.0
    %214 = vmatpush1.msra.mxu0 %v185
    %215 = vmatprep.subr.mxu0 0.0
    %216 = vmatpush1.msra.mxu0 %v186
    %217 = vmatprep.subr.mxu0 0.0
    %218 = vmatpush1.msra.mxu0 %v187
    %219 = vmatprep.subr.mxu0 0.0
    %220 = vmatpush1.msra.mxu0 %v188
    %221 = vmatprep.subr.mxu0 0.0
    %222 = vmatpush1.msra.mxu0 %v189
    %223 = vmatprep.subr.mxu0 0.0
    %224 = vmatpush1.msra.mxu0 %v190
    %225 = vmatprep.subr.mxu0 0.0
    %226 = vmatpush1.msra.mxu0 %v191
    %227 = vmatprep.subr.mxu0 0.0
    %228 = vmatpush1.msra.mxu0 %v192
    %229 = vmatprep.subr.mxu0 0.0
    %230 = vmatpush1.msra.mxu0 %v193
    %231 = vmatprep.subr.mxu0 0.0
    %232 = vmatpush1.msra.mxu0 %v194
    %233 = vmatprep.subr.mxu0 0.0
    %234 = vmatpush1.msra.mxu0 %v195
    %235 = vmatprep.subr.mxu0 0.0
    %236 = vmatpush1.msra.mxu0 0.0
    %237 = vmatprep.subr.mxu0 0.0
    %238 = vmatpush1.msra.mxu0 0.0
    %239 = vmatprep.subr.mxu0 0.0
    %240 = vmatpush1.msra.mxu0 0.0
    %241 = vmatprep.subr.mxu0 0.0
    %242 = vmatpush1.msra.mxu0 0.0
    %243 = vmatprep.subr.mxu0 0.0
    %244 = vmatpush1.msra.mxu0 0.0
    %245 = vmatprep.subr.mxu0 0.0
    %246 = vmatpush1.msra.mxu0 0.0
    %247 = vmatprep.subr.mxu0 0.0
    %248 = vmatpush1.msra.mxu0 0.0
    %249 = vmatprep.subr.mxu0 0.0
    %250 = vmatpush1.msra.mxu0 0.0
    %251 = vmatprep.subr.mxu0 0.0
    %252 = vmatpush1.msra.mxu0 0.0
    %253 = vmatprep.subr.mxu0 0.0
    %254 = vmatpush1.msra.mxu0 0.0
    %255 = vmatprep.subr.mxu0 0.0
    %256 = vmatpush1.msra.mxu0 0.0
    %257 = vmatprep.subr.mxu0 0.0
    %258 = vmatpush1.msra.mxu0 0.0
    %259 = vmatprep.subr.mxu0 0.0
    %260 = vmatpush1.msra.mxu0 0.0
    %261 = vmatprep.subr.mxu0 0.0
    %262 = vmatpush1.msra.mxu0 0.0
    %263 = vmatprep.subr.mxu0 0.0
    %264 = vmatpush1.msra.mxu0 0.0
    %265 = vmatprep.subr.mxu0 0.0
    %266 = vmatpush1.msra.mxu0 0.0
    %267 = vmatprep.mubr.f32.mxu0 0.0
    %268 = vmatmul.mubr.f32.gmra.mrb[0].mxu0 %v178
    %v269 = vpop.f32.mrb[0].mxu0
    %v270 = vadd.f32 %v201, %v269
    %v271 = vpop.f32.mrb[0].mxu0
    %272 = vmatprep.mubr.f32.mxu0 0.0
    %273 = vmatmul.mubr.f32.gmra.mrb[0].mxu0 %v179
    %v274 = vpop.f32.mrb[0].mxu0
    %v275 = vadd.f32 %v201, %v274
    %v276 = vpop.f32.mrb[0].mxu0
    %277 = vdwg.mxu0
    %v278 = vtanh.pop %v270
    %v279 = vtanh.pop %v275
    %v280 = vld [vmem:[#allocation8] sm:$0xff]
    %v281 = vld [vmem:[#allocation8 + $0x8] sm:$0xff]
    %v282 = vld [vmem:[#allocation8 + $0x10] sm:$0xff]
    %v283 = vld [vmem:[#allocation8 + $0x18] sm:$0xff]
    %v284 = vld [vmem:[#allocation8 + $0x20] sm:$0xff]
    %v285 = vld [vmem:[#allocation8 + $0x28] sm:$0xff]
    %v286 = vld [vmem:[#allocation8 + $0x30] sm:$0xff]
    %v287 = vld [vmem:[#allocation8 + $0x38] sm:$0xff]
    %v288 = vld [vmem:[#allocation8 + $0x40] sm:$0xff]
    %v289 = vld [vmem:[#allocation8 + $0x48] sm:$0xff]
    %v290 = vld [vmem:[#allocation8 + $0x50] sm:$0xff]
    %v291 = vld [vmem:[#allocation8 + $0x58] sm:$0xff]
    %v292 = vld [vmem:[#allocation8 + $0x60] sm:$0xff]
    %v293 = vld [vmem:[#allocation8 + $0x68] sm:$0xff]
    %v294 = vld [vmem:[#allocation8 + $0x70] sm:$0xff]
    %v295 = vld [vmem:[#allocation8 + $0x78] sm:$0xff]
    %v296 = vld [vmem:[#allocation8 + $0x80] sm:$0xff]
    %v297 = vld [vmem:[#allocation8 + $0x88] sm:$0xff]
    %v298 = vld [vmem:[#allocation8 + $0x90] sm:$0xff]
    %v299 = vld [vmem:[#allocation8 + $0x98] sm:$0xff]
    %v300 = vld [vmem:[#allocation8 + $0xa0] sm:$0xff]
    %v301 = vld [vmem:[#allocation8 + $0xa8] sm:$0xff]
    %v302 = vld [vmem:[#allocation8 + $0xb0] sm:$0xff]
    %v303 = vld [vmem:[#allocation8 + $0xb8] sm:$0xff]
    %v304 = vld [vmem:[#allocation8 + $0xc0] sm:$0xff]
    %v305 = vld [vmem:[#allocation8 + $0xc8] sm:$0xff]
    %v306 = vld [vmem:[#allocation8 + $0xd0] sm:$0xff]
    %v307 = vld [vmem:[#allocation8 + $0xd8] sm:$0xff]
    %v308 = vld [vmem:[#allocation8 + $0xe0] sm:$0xff]
    %v309 = vld [vmem:[#allocation8 + $0xe8] sm:$0xff]
    %v310 = vld [vmem:[#allocation8 + $0xf0] sm:$0xff]
    %v311 = vld [vmem:[#allocation8 + $0xf8] sm:$0xff]
    %v312 = vld [vmem:[#allocation8 + $0x100] sm:$0xff]
    %v313 = vld [vmem:[#allocation8 + $0x108] sm:$0xff]
    %v314 = vld [vmem:[#allocation8 + $0x110] sm:$0xff]
    %v315 = vld [vmem:[#allocation8 + $0x118] sm:$0xff]
    %v316 = vld [vmem:[#allocation8 + $0x120] sm:$0xff]
    %v317 = vld [vmem:[#allocation8 + $0x128] sm:$0xff]
    %v318 = vld [vmem:[#allocation8 + $0x130] sm:$0xff]
    %v319 = vld [vmem:[#allocation8 + $0x138] sm:$0xff]
    %v320 = vld [vmem:[#allocation8 + $0x140] sm:$0xff]
    %v321 = vld [vmem:[#allocation8 + $0x148] sm:$0xff]
    %v322 = vld [vmem:[#allocation8 + $0x150] sm:$0xff]
    %v323 = vld [vmem:[#allocation8 + $0x158] sm:$0xff]
    %v324 = vld [vmem:[#allocation8 + $0x160] sm:$0xff]
    %v325 = vld [vmem:[#allocation8 + $0x168] sm:$0xff]
    %v326 = vld [vmem:[#allocation8 + $0x170] sm:$0xff]
    %v327 = vld [vmem:[#allocation8 + $0x178] sm:$0xff]
    %v328 = vld [vmem:[#allocation8 + $0x180] sm:$0xff]
    %v329 = vld [vmem:[#allocation8 + $0x188] sm:$0xff]
    %v330 = vld [vmem:[#allocation8 + $0x190] sm:$0xff]
    %v331 = vld [vmem:[#allocation8 + $0x198] sm:$0xff]
    %v332 = vld [vmem:[#allocation8 + $0x1a0] sm:$0xff]
    %v333 = vld [vmem:[#allocation8 + $0x1a8] sm:$0xff]
    %v334 = vld [vmem:[#allocation8 + $0x1b0] sm:$0xff]
    %v335 = vld [vmem:[#allocation8 + $0x1b8] sm:$0xff]
    %v336 = vld [vmem:[#allocation8 + $0x1c0] sm:$0xff]
    %v337 = vld [vmem:[#allocation8 + $0x1c8] sm:$0xff]
    %v338 = vld [vmem:[#allocation8 + $0x1d0] sm:$0xff]
    %v339 = vld [vmem:[#allocation8 + $0x1d8] sm:$0xff]
    %v340 = vld [vmem:[#allocation8 + $0x1e0] sm:$0xff]
    %v341 = vld [vmem:[#allocation8 + $0x1e8] sm:$0xff]
    %v342 = vld [vmem:[#allocation8 + $0x1f0] sm:$0xff]
    %v343 = vld [vmem:[#allocation8 + $0x1f8] sm:$0xff]
    %v344 = vld [vmem:[#allocation8 + $0x200] sm:$0xff]
    %v345 = vld [vmem:[#allocation8 + $0x208] sm:$0xff]
    %v346 = vld [vmem:[#allocation8 + $0x210] sm:$0xff]
    %v347 = vld [vmem:[#allocation8 + $0x218] sm:$0xff]
    %v348 = vld [vmem:[#allocation8 + $0x220] sm:$0xff]
    %v349 = vld [vmem:[#allocation8 + $0x228] sm:$0xff]
    %v350 = vld [vmem:[#allocation8 + $0x230] sm:$0xff]
    %v351 = vld [vmem:[#allocation8 + $0x238] sm:$0xff]
    %v352 = vld [vmem:[#allocation8 + $0x240] sm:$0xff]
    %v353 = vld [vmem:[#allocation8 + $0x248] sm:$0xff]
    %v354 = vld [vmem:[#allocation8 + $0x250] sm:$0xff]
    %v355 = vld [vmem:[#allocation8 + $0x258] sm:$0xff]
    %v356 = vld [vmem:[#allocation8 + $0x260] sm:$0xff]
    %v357 = vld [vmem:[#allocation8 + $0x268] sm:$0xff]
    %v358 = vld [vmem:[#allocation8 + $0x270] sm:$0xff]
    %v359 = vld [vmem:[#allocation8 + $0x278] sm:$0xff]
    %v360 = vld [vmem:[#allocation10] sm:$0x1f]
    %v362 = vlaneseq
    %v363 = vshrl.u32 %v362, 7
    %v364 = vsub.s32 0, %v363
    %v365 = vrot.slane %v360, %v364
    %v366 = vlaneseq
    %v367 = vshrl.u32 %v366, 7
    %v368 = vsub.s32 1, %v367
    %v369 = vrot.slane %v360, %v368
    %v370 = vlaneseq
    %v371 = vshrl.u32 %v370, 7
    %v372 = vsub.s32 2, %v371
    %v373 = vrot.slane %v360, %v372
    %v374 = vlaneseq
    %v375 = vshrl.u32 %v374, 7
    %v376 = vsub.s32 3, %v375
    %v377 = vrot.slane %v360, %v376
    %v378 = vlaneseq
    %v379 = vshrl.u32 %v378, 7
    %v380 = vsub.s32 4, %v379
    %v381 = vrot.slane %v360, %v380
    %387 = vmatprep.subr.mxu0 %v281
    %388 = vmatpush1.msra.mxu0 %v280
    %389 = vmatprep.subr.mxu0 %v286
    %390 = vmatpush1.msra.mxu0 %v285
    %391 = vmatprep.subr.mxu0 %v291
    %392 = vmatpush1.msra.mxu0 %v290
    %393 = vmatprep.subr.mxu0 %v296
    %394 = vmatpush1.msra.mxu0 %v295
    %395 = vmatprep.subr.mxu0 %v301
    %396 = vmatpush1.msra.mxu0 %v300
    %397 = vmatprep.subr.mxu0 %v306
    %398 = vmatpush1.msra.mxu0 %v305
    %399 = vmatprep.subr.mxu0 %v311
    %400 = vmatpush1.msra.mxu0 %v310
    %401 = vmatprep.subr.mxu0 %v316
    %402 = vmatpush1.msra.mxu0 %v315
    %403 = vmatprep.subr.mxu0 %v321
    %404 = vmatpush1.msra.mxu0 %v320
    %405 = vmatprep.subr.mxu0 %v326
    %406 = vmatpush1.msra.mxu0 %v325
    %407 = vmatprep.subr.mxu0 %v331
    %408 = vmatpush1.msra.mxu0 %v330
    %409 = vmatprep.subr.mxu0 %v336
    %410 = vmatpush1.msra.mxu0 %v335
    %411 = vmatprep.subr.mxu0 %v341
    %412 = vmatpush1.msra.mxu0 %v340
    %413 = vmatprep.subr.mxu0 %v346
    %414 = vmatpush1.msra.mxu0 %v345
    %415 = vmatprep.subr.mxu0 %v351
    %416 = vmatpush1.msra.mxu0 %v350
    %417 = vmatprep.subr.mxu0 %v356
    %418 = vmatpush1.msra.mxu0 %v355
    %419 = vmatprep.subr.mxu0 0.0
    %420 = vmatpush1.msra.mxu0 0.0
    %421 = vmatprep.subr.mxu0 0.0
    %422 = vmatpush1.msra.mxu0 0.0
    %423 = vmatprep.subr.mxu0 0.0
    %424 = vmatpush1.msra.mxu0 0.0
    %425 = vmatprep.subr.mxu0 0.0
    %426 = vmatpush1.msra.mxu0 0.0
    %427 = vmatprep.subr.mxu0 0.0
    %428 = vmatpush1.msra.mxu0 0.0
    %429 = vmatprep.subr.mxu0 0.0
    %430 = vmatpush1.msra.mxu0 0.0
    %431 = vmatprep.subr.mxu0 0.0
    %432 = vmatpush1.msra.mxu0 0.0
    %433 = vmatprep.subr.mxu0 0.0
    %434 = vmatpush1.msra.mxu0 0.0
    %435 = vmatprep.subr.mxu0 0.0
    %436 = vmatpush1.msra.mxu0 0.0
    %437 = vmatprep.subr.mxu0 0.0
    %438 = vmatpush1.msra.mxu0 0.0
    %439 = vmatprep.subr.mxu0 0.0
    %440 = vmatpush1.msra.mxu0 0.0
    %441 = vmatprep.subr.mxu0 0.0
    %442 = vmatpush1.msra.mxu0 0.0
    %443 = vmatprep.subr.mxu0 0.0
    %444 = vmatpush1.msra.mxu0 0.0
    %445 = vmatprep.subr.mxu0 0.0
    %446 = vmatpush1.msra.mxu0 0.0
    %447 = vmatprep.subr.mxu0 0.0
    %448 = vmatpush1.msra.mxu0 0.0
    %449 = vmatprep.subr.mxu0 0.0
    %450 = vmatpush1.msra.mxu0 0.0
    %451 = vmatprep.mubr.f32.mxu0 0.0
    %452 = vmatmul.mubr.f32.gmra.mrb[0].mxu0 %v278
    %v453 = vpop.f32.mrb[0].mxu0
    %v454 = vadd.f32 %v365, %v453
    %v455 = vpop.f32.mrb[0].mxu0
    %v456 = vadd.f32 %v369, %v455
    %457 = vmatprep.mubr.f32.mxu0 0.0
    %458 = vmatmul.mubr.f32.gmra.mrb[0].mxu0 %v279
    %v459 = vpop.f32.mrb[0].mxu0
    %v460 = vadd.f32 %v365, %v459
    %v461 = vpop.f32.mrb[0].mxu0
    %v462 = vadd.f32 %v369, %v461
    %463 = vdwg.mxu0
    %464 = vmatprep.subr.mxu0 %v283
    %465 = vmatpush1.msra.mxu0 %v282
    %466 = vmatprep.subr.mxu0 %v288
    %467 = vmatpush1.msra.mxu0 %v287
    %468 = vmatprep.subr.mxu0 %v293
    %469 = vmatpush1.msra.mxu0 %v292
    %470 = vmatprep.subr.mxu0 %v298
    %471 = vmatpush1.msra.mxu0 %v297
    %472 = vmatprep.subr.mxu0 %v303
    %473 = vmatpush1.msra.mxu0 %v302
    %474 = vmatprep.subr.mxu0 %v308
    %475 = vmatpush1.msra.mxu0 %v307
    %476 = vmatprep.subr.mxu0 %v313
    %477 = vmatpush1.msra.mxu0 %v312
    %478 = vmatprep.subr.mxu0 %v318
    %479 = vmatpush1.msra.mxu0 %v317
    %480 = vmatprep.subr.mxu0 %v323
    %481 = vmatpush1.msra.mxu0 %v322
    %482 = vmatprep.subr.mxu0 %v328
    %483 = vmatpush1.msra.mxu0 %v327
    %484 = vmatprep.subr.mxu0 %v333
    %485 = vmatpush1.msra.mxu0 %v332
    %486 = vmatprep.subr.mxu0 %v338
    %487 = vmatpush1.msra.mxu0 %v337
    %488 = vmatprep.subr.mxu0 %v343
    %489 = vmatpush1.msra.mxu0 %v342
    %490 = vmatprep.subr.mxu0 %v348
    %491 = vmatpush1.msra.mxu0 %v347
    %492 = vmatprep.subr.mxu0 %v353
    %493 = vmatpush1.msra.mxu0 %v352
    %494 = vmatprep.subr.mxu0 %v358
    %495 = vmatpush1.msra.mxu0 %v357
    %496 = vmatprep.subr.mxu0 0.0
    %497 = vmatpush1.msra.mxu0 0.0
    %498 = vmatprep.subr.mxu0 0.0
    %499 = vmatpush1.msra.mxu0 0.0
    %500 = vmatprep.subr.mxu0 0.0
    %501 = vmatpush1.msra.mxu0 0.0
    %502 = vmatprep.subr.mxu0 0.0
    %503 = vmatpush1.msra.mxu0 0.0
    %504 = vmatprep.subr.mxu0 0.0
    %505 = vmatpush1.msra.mxu0 0.0
    %506 = vmatprep.subr.mxu0 0.0
    %507 = vmatpush1.msra.mxu0 0.0
    %508 = vmatprep.subr.mxu0 0.0
    %509 = vmatpush1.msra.mxu0 0.0
    %510 = vmatprep.subr.mxu0 0.0
    %511 = vmatpush1.msra.mxu0 0.0
    %512 = vmatprep.subr.mxu0 0.0
    %513 = vmatpush1.msra.mxu0 0.0
    %514 = vmatprep.subr.mxu0 0.0
    %515 = vmatpush1.msra.mxu0 0.0
    %516 = vmatprep.subr.mxu0 0.0
    %517 = vmatpush1.msra.mxu0 0.0
    %518 = vmatprep.subr.mxu0 0.0
    %519 = vmatpush1.msra.mxu0 0.0
    %520 = vmatprep.subr.mxu0 0.0
    %521 = vmatpush1.msra.mxu0 0.0
    %522 = vmatprep.subr.mxu0 0.0
    %523 = vmatpush1.msra.mxu0 0.0
    %524 = vmatprep.subr.mxu0 0.0
    %525 = vmatpush1.msra.mxu0 0.0
    %526 = vmatprep.subr.mxu0 0.0
    %527 = vmatpush1.msra.mxu0 0.0
    %528 = vmatprep.mubr.f32.mxu0 0.0
    %529 = vmatmul.mubr.f32.gmra.mrb[0].mxu0 %v278
    %v530 = vpop.f32.mrb[0].mxu0
    %v531 = vadd.f32 %v373, %v530
    %v532 = vpop.f32.mrb[0].mxu0
    %v533 = vadd.f32 %v377, %v532
    %534 = vmatprep.mubr.f32.mxu0 0.0
    %535 = vmatmul.mubr.f32.gmra.mrb[0].mxu0 %v279
    %v536 = vpop.f32.mrb[0].mxu0
    %v537 = vadd.f32 %v373, %v536
    %v538 = vpop.f32.mrb[0].mxu0
    %v539 = vadd.f32 %v377, %v538
    %540 = vdwg.mxu0
    %541 = vmatprep.subr.mxu0 0.0
    %542 = vmatpush1.msra.mxu0 %v284
    %543 = vmatprep.subr.mxu0 0.0
    %544 = vmatpush1.msra.mxu0 %v289
    %545 = vmatprep.subr.mxu0 0.0
    %546 = vmatpush1.msra.mxu0 %v294
    %547 = vmatprep.subr.mxu0 0.0
    %548 = vmatpush1.msra.mxu0 %v299
    %549 = vmatprep.subr.mxu0 0.0
    %550 = vmatpush1.msra.mxu0 %v304
    %551 = vmatprep.subr.mxu0 0.0
    %552 = vmatpush1.msra.mxu0 %v309
    %553 = vmatprep.subr.mxu0 0.0
    %554 = vmatpush1.msra.mxu0 %v314
    %555 = vmatprep.subr.mxu0 0.0
    %556 = vmatpush1.msra.mxu0 %v319
    %557 = vmatprep.subr.mxu0 0.0
    %558 = vmatpush1.msra.mxu0 %v324
    %559 = vmatprep.subr.mxu0 0.0
    %560 = vmatpush1.msra.mxu0 %v329
    %561 = vmatprep.subr.mxu0 0.0
    %562 = vmatpush1.msra.mxu0 %v334
    %563 = vmatprep.subr.mxu0 0.0
    %564 = vmatpush1.msra.mxu0 %v339
    %565 = vmatprep.subr.mxu0 0.0
    %566 = vmatpush1.msra.mxu0 %v344
    %567 = vmatprep.subr.mxu0 0.0
    %568 = vmatpush1.msra.mxu0 %v349
    %569 = vmatprep.subr.mxu0 0.0
    %570 = vmatpush1.msra.mxu0 %v354
    %571 = vmatprep.subr.mxu0 0.0
    %572 = vmatpush1.msra.mxu0 %v359
    %573 = vmatprep.subr.mxu0 0.0
    %574 = vmatpush1.msra.mxu0 0.0
    %575 = vmatprep.subr.mxu0 0.0
    %576 = vmatpush1.msra.mxu0 0.0
    %577 = vmatprep.subr.mxu0 0.0
    %578 = vmatpush1.msra.mxu0 0.0
    %579 = vmatprep.subr.mxu0 0.0
    %580 = vmatpush1.msra.mxu0 0.0
    %581 = vmatprep.subr.mxu0 0.0
    %582 = vmatpush1.msra.mxu0 0.0
    %583 = vmatprep.subr.mxu0 0.0
    %584 = vmatpush1.msra.mxu0 0.0
    %585 = vmatprep.subr.mxu0 0.0
    %586 = vmatpush1.msra.mxu0 0.0
    %587 = vmatprep.subr.mxu0 0.0
    %588 = vmatpush1.msra.mxu0 0.0
    %589 = vmatprep.subr.mxu0 0.0
    %590 = vmatpush1.msra.mxu0 0.0
    %591 = vmatprep.subr.mxu0 0.0
    %592 = vmatpush1.msra.mxu0 0.0
    %593 = vmatprep.subr.mxu0 0.0
    %594 = vmatpush1.msra.mxu0 0.0
    %595 = vmatprep.subr.mxu0 0.0
    %596 = vmatpush1.msra.mxu0 0.0
    %597 = vmatprep.subr.mxu0 0.0
    %598 = vmatpush1.msra.mxu0 0.0
    %599 = vmatprep.subr.mxu0 0.0
    %600 = vmatpush1.msra.mxu0 0.0
    %601 = vmatprep.subr.mxu0 0.0
    %602 = vmatpush1.msra.mxu0 0.0
    %603 = vmatprep.subr.mxu0 0.0
    %604 = vmatpush1.msra.mxu0 0.0
    %605 = vmatprep.mubr.f32.mxu0 0.0
    %606 = vmatmul.mubr.f32.gmra.mrb[0].mxu0 %v278
    %v607 = vpop.f32.mrb[0].mxu0
    %v608 = vadd.f32 %v381, %v607
    %v609 = vpop.f32.mrb[0].mxu0
    %610 = vmatprep.mubr.f32.mxu0 0.0
    %611 = vmatmul.mubr.f32.gmra.mrb[0].mxu0 %v279
    %v612 = vpop.f32.mrb[0].mxu0
    %v613 = vadd.f32 %v381, %v612
    %v614 = vpop.f32.mrb[0].mxu0
    %615 = vdwg.mxu0
    %v616 = vtanh.pop %v454
    %v617 = vtanh.pop %v456
    %v618 = vtanh.pop %v531
    %v619 = vtanh.pop %v533
    %v620 = vtanh.pop %v608
    %v621 = vtanh.pop %v460
    %v622 = vtanh.pop %v462
    %v623 = vtanh.pop %v537
    %v624 = vtanh.pop %v539
    %v625 = vtanh.pop %v613
    %v626 = vld [vmem:[#allocation11] sm:$0xff]
    %v627 = vld [vmem:[#allocation11 + $0x8] sm:$0xff]
    %v628 = vld [vmem:[#allocation11 + $0x10] sm:$0xff]
    %v629 = vld [vmem:[#allocation11 + $0x18] sm:$0xff]
    %v630 = vld [vmem:[#allocation11 + $0x20] sm:$0xff]
    %v631 = vld [vmem:[#allocation11 + $0x28] sm:$0xff]
    %v632 = vld [vmem:[#allocation11 + $0x30] sm:$0xff]
    %v633 = vld [vmem:[#allocation11 + $0x38] sm:$0xff]
    %v634 = vld [vmem:[#allocation11 + $0x40] sm:$0xff]
    %v635 = vld [vmem:[#allocation11 + $0x48] sm:$0xff]
    %v636 = vld [vmem:[#allocation11 + $0x50] sm:$0xff]
    %v637 = vld [vmem:[#allocation11 + $0x58] sm:$0xff]
    %v638 = vld [vmem:[#allocation11 + $0x60] sm:$0xff]
    %v639 = vld [vmem:[#allocation11 + $0x68] sm:$0xff]
    %v640 = vld [vmem:[#allocation11 + $0x70] sm:$0xff]
    %v641 = vld [vmem:[#allocation11 + $0x78] sm:$0xff]
    %v642 = vld [vmem:[#allocation11 + $0x80] sm:$0xff]
    %v643 = vld [vmem:[#allocation11 + $0x88] sm:$0xff]
    %v644 = vld [vmem:[#allocation11 + $0x90] sm:$0xff]
    %v645 = vld [vmem:[#allocation11 + $0x98] sm:$0xff]
    %v646 = vld [vmem:[#allocation11 + $0xa0] sm:$0xff]
    %v647 = vld [vmem:[#allocation11 + $0xa8] sm:$0xff]
    %v648 = vld [vmem:[#allocation11 + $0xb0] sm:$0xff]
    %v649 = vld [vmem:[#allocation11 + $0xb8] sm:$0xff]
    %v650 = vld [vmem:[#allocation11 + $0xc0] sm:$0xff]
    %v651 = vld [vmem:[#allocation11 + $0xc8] sm:$0xff]
    %v652 = vld [vmem:[#allocation11 + $0xd0] sm:$0xff]
    %v653 = vld [vmem:[#allocation11 + $0xd8] sm:$0xff]
    %v654 = vld [vmem:[#allocation11 + $0xe0] sm:$0xff]
    %v655 = vld [vmem:[#allocation11 + $0xe8] sm:$0xff]
    %v656 = vld [vmem:[#allocation11 + $0xf0] sm:$0xff]
    %v657 = vld [vmem:[#allocation11 + $0xf8] sm:$0xff]
    %v658 = vld [vmem:[#allocation11 + $0x100] sm:$0xff]
    %v659 = vld [vmem:[#allocation11 + $0x108] sm:$0xff]
    %v660 = vld [vmem:[#allocation11 + $0x110] sm:$0xff]
    %v661 = vld [vmem:[#allocation11 + $0x118] sm:$0xff]
    %v662 = vld [vmem:[#allocation11 + $0x120] sm:$0xff]
    %v663 = vld [vmem:[#allocation11 + $0x128] sm:$0xff]
    %v664 = vld [vmem:[#allocation11 + $0x130] sm:$0xff]
    %v665 = vld [vmem:[#allocation11 + $0x138] sm:$0xff]
    %v666 = vld [vmem:[#allocation11 + $0x140] sm:$0xff]
    %v667 = vld [vmem:[#allocation11 + $0x148] sm:$0xff]
    %v668 = vld [vmem:[#allocation11 + $0x150] sm:$0xff]
    %v669 = vld [vmem:[#allocation11 + $0x158] sm:$0xff]
    %v670 = vld [vmem:[#allocation11 + $0x160] sm:$0xff]
    %v671 = vld [vmem:[#allocation11 + $0x168] sm:$0xff]
    %v672 = vld [vmem:[#allocation11 + $0x170] sm:$0xff]
    %v673 = vld [vmem:[#allocation11 + $0x178] sm:$0xff]
    %v674 = vld [vmem:[#allocation11 + $0x180] sm:$0xff]
    %v675 = vld [vmem:[#allocation11 + $0x188] sm:$0xff]
    %v676 = vld [vmem:[#allocation11 + $0x190] sm:$0xff]
    %v677 = vld [vmem:[#allocation11 + $0x198] sm:$0xff]
    %v678 = vld [vmem:[#allocation11 + $0x1a0] sm:$0xff]
    %v679 = vld [vmem:[#allocation11 + $0x1a8] sm:$0xff]
    %v680 = vld [vmem:[#allocation11 + $0x1b0] sm:$0xff]
    %v681 = vld [vmem:[#allocation11 + $0x1b8] sm:$0xff]
    %v682 = vld [vmem:[#allocation11 + $0x1c0] sm:$0xff]
    %v683 = vld [vmem:[#allocation11 + $0x1c8] sm:$0xff]
    %v684 = vld [vmem:[#allocation11 + $0x1d0] sm:$0xff]
    %v685 = vld [vmem:[#allocation11 + $0x1d8] sm:$0xff]
    %v686 = vld [vmem:[#allocation11 + $0x1e0] sm:$0xff]
    %v687 = vld [vmem:[#allocation11 + $0x1e8] sm:$0xff]
    %v688 = vld [vmem:[#allocation11 + $0x1f0] sm:$0xff]
    %v689 = vld [vmem:[#allocation11 + $0x1f8] sm:$0xff]
    %v690 = vld [vmem:[#allocation11 + $0x200] sm:$0xff]
    %v691 = vld [vmem:[#allocation11 + $0x208] sm:$0xff]
    %v692 = vld [vmem:[#allocation11 + $0x210] sm:$0xff]
    %v693 = vld [vmem:[#allocation11 + $0x218] sm:$0xff]
    %v694 = vld [vmem:[#allocation11 + $0x220] sm:$0xff]
    %v695 = vld [vmem:[#allocation11 + $0x228] sm:$0xff]
    %v696 = vld [vmem:[#allocation11 + $0x230] sm:$0xff]
    %v697 = vld [vmem:[#allocation11 + $0x238] sm:$0xff]
    %v698 = vld [vmem:[#allocation11 + $0x240] sm:$0xff]
    %v699 = vld [vmem:[#allocation11 + $0x248] sm:$0xff]
    %v700 = vld [vmem:[#allocation11 + $0x250] sm:$0xff]
    %v701 = vld [vmem:[#allocation11 + $0x258] sm:$0xff]
    %v702 = vld [vmem:[#allocation11 + $0x260] sm:$0xff]
    %v703 = vld [vmem:[#allocation11 + $0x268] sm:$0xff]
    %v704 = vld [vmem:[#allocation11 + $0x270] sm:$0xff]
    %v705 = vld [vmem:[#allocation11 + $0x278] sm:$0xff]
    %v706 = vld [vmem:[#allocation11 + $0x280] sm:$0xff]
    %v707 = vld [vmem:[#allocation11 + $0x288] sm:$0xff]
    %v708 = vld [vmem:[#allocation11 + $0x290] sm:$0xff]
    %v709 = vld [vmem:[#allocation11 + $0x298] sm:$0xff]
    %v710 = vld [vmem:[#allocation11 + $0x2a0] sm:$0xff]
    %v711 = vld [vmem:[#allocation11 + $0x2a8] sm:$0xff]
    %v712 = vld [vmem:[#allocation11 + $0x2b0] sm:$0xff]
    %v713 = vld [vmem:[#allocation11 + $0x2b8] sm:$0xff]
    %v714 = vld [vmem:[#allocation11 + $0x2c0] sm:$0xff]
    %v715 = vld [vmem:[#allocation11 + $0x2c8] sm:$0xff]
    %v716 = vld [vmem:[#allocation11 + $0x2d0] sm:$0xff]
    %v717 = vld [vmem:[#allocation11 + $0x2d8] sm:$0xff]
    %v718 = vld [vmem:[#allocation11 + $0x2e0] sm:$0xff]
    %v719 = vld [vmem:[#allocation11 + $0x2e8] sm:$0xff]
    %v720 = vld [vmem:[#allocation11 + $0x2f0] sm:$0xff]
    %v721 = vld [vmem:[#allocation11 + $0x2f8] sm:$0xff]
    %v722 = vld [vmem:[#allocation11 + $0x300] sm:$0xff]
    %v723 = vld [vmem:[#allocation11 + $0x308] sm:$0xff]
    %v724 = vld [vmem:[#allocation11 + $0x310] sm:$0xff]
    %v725 = vld [vmem:[#allocation11 + $0x318] sm:$0xff]
    %v726 = vld [vmem:[#allocation11 + $0x320] sm:$0xff]
    %v727 = vld [vmem:[#allocation11 + $0x328] sm:$0xff]
    %v728 = vld [vmem:[#allocation11 + $0x330] sm:$0xff]
    %v729 = vld [vmem:[#allocation11 + $0x338] sm:$0xff]
    %v730 = vld [vmem:[#allocation11 + $0x340] sm:$0xff]
    %v731 = vld [vmem:[#allocation11 + $0x348] sm:$0xff]
    %v732 = vld [vmem:[#allocation11 + $0x350] sm:$0xff]
    %v733 = vld [vmem:[#allocation11 + $0x358] sm:$0xff]
    %v734 = vld [vmem:[#allocation11 + $0x360] sm:$0xff]
    %v735 = vld [vmem:[#allocation11 + $0x368] sm:$0xff]
    %v736 = vld [vmem:[#allocation11 + $0x370] sm:$0xff]
    %v737 = vld [vmem:[#allocation11 + $0x378] sm:$0xff]
    %v738 = vld [vmem:[#allocation11 + $0x380] sm:$0xff]
    %v739 = vld [vmem:[#allocation11 + $0x388] sm:$0xff]
    %v740 = vld [vmem:[#allocation11 + $0x390] sm:$0xff]
    %v741 = vld [vmem:[#allocation11 + $0x398] sm:$0xff]
    %v742 = vld [vmem:[#allocation11 + $0x3a0] sm:$0xff]
    %v743 = vld [vmem:[#allocation11 + $0x3a8] sm:$0xff]
    %v744 = vld [vmem:[#allocation11 + $0x3b0] sm:$0xff]
    %v745 = vld [vmem:[#allocation11 + $0x3b8] sm:$0xff]
    %v746 = vld [vmem:[#allocation11 + $0x3c0] sm:$0xff]
    %v747 = vld [vmem:[#allocation11 + $0x3c8] sm:$0xff]
    %v748 = vld [vmem:[#allocation11 + $0x3d0] sm:$0xff]
    %v749 = vld [vmem:[#allocation11 + $0x3d8] sm:$0xff]
    %v750 = vld [vmem:[#allocation11 + $0x3e0] sm:$0xff]
    %v751 = vld [vmem:[#allocation11 + $0x3e8] sm:$0xff]
    %v752 = vld [vmem:[#allocation11 + $0x3f0] sm:$0xff]
    %v753 = vld [vmem:[#allocation11 + $0x3f8] sm:$0xff]
    %v754 = vld [vmem:[#allocation11 + $0x400] sm:$0xff]
    %v755 = vld [vmem:[#allocation11 + $0x408] sm:$0xff]
    %v756 = vld [vmem:[#allocation11 + $0x410] sm:$0xff]
    %v757 = vld [vmem:[#allocation11 + $0x418] sm:$0xff]
    %v758 = vld [vmem:[#allocation11 + $0x420] sm:$0xff]
    %v759 = vld [vmem:[#allocation11 + $0x428] sm:$0xff]
    %v760 = vld [vmem:[#allocation11 + $0x430] sm:$0xff]
    %v761 = vld [vmem:[#allocation11 + $0x438] sm:$0xff]
    %v762 = vld [vmem:[#allocation11 + $0x440] sm:$0xff]
    %v763 = vld [vmem:[#allocation11 + $0x448] sm:$0xff]
    %v764 = vld [vmem:[#allocation11 + $0x450] sm:$0xff]
    %v765 = vld [vmem:[#allocation11 + $0x458] sm:$0xff]
    %v766 = vld [vmem:[#allocation11 + $0x460] sm:$0xff]
    %v767 = vld [vmem:[#allocation11 + $0x468] sm:$0xff]
    %v768 = vld [vmem:[#allocation11 + $0x470] sm:$0xff]
    %v769 = vld [vmem:[#allocation11 + $0x478] sm:$0xff]
    %v770 = vld [vmem:[#allocation11 + $0x480] sm:$0xff]
    %v771 = vld [vmem:[#allocation11 + $0x488] sm:$0xff]
    %v772 = vld [vmem:[#allocation11 + $0x490] sm:$0xff]
    %v773 = vld [vmem:[#allocation11 + $0x498] sm:$0xff]
    %v774 = vld [vmem:[#allocation11 + $0x4a0] sm:$0xff]
    %v775 = vld [vmem:[#allocation11 + $0x4a8] sm:$0xff]
    %v776 = vld [vmem:[#allocation11 + $0x4b0] sm:$0xff]
    %v777 = vld [vmem:[#allocation11 + $0x4b8] sm:$0xff]
    %v778 = vld [vmem:[#allocation11 + $0x4c0] sm:$0xff]
    %v779 = vld [vmem:[#allocation11 + $0x4c8] sm:$0xff]
    %v780 = vld [vmem:[#allocation11 + $0x4d0] sm:$0xff]
    %v781 = vld [vmem:[#allocation11 + $0x4d8] sm:$0xff]
    %v782 = vld [vmem:[#allocation11 + $0x4e0] sm:$0xff]
    %v783 = vld [vmem:[#allocation11 + $0x4e8] sm:$0xff]
    %v784 = vld [vmem:[#allocation11 + $0x4f0] sm:$0xff]
    %v785 = vld [vmem:[#allocation11 + $0x4f8] sm:$0xff]
    %v786 = vld [vmem:[#allocation11 + $0x500] sm:$0xff]
    %v787 = vld [vmem:[#allocation11 + $0x508] sm:$0xff]
    %v788 = vld [vmem:[#allocation11 + $0x510] sm:$0xff]
    %v789 = vld [vmem:[#allocation11 + $0x518] sm:$0xff]
    %v790 = vld [vmem:[#allocation11 + $0x520] sm:$0xff]
    %v791 = vld [vmem:[#allocation11 + $0x528] sm:$0xff]
    %v792 = vld [vmem:[#allocation11 + $0x530] sm:$0xff]
    %v793 = vld [vmem:[#allocation11 + $0x538] sm:$0xff]
    %v794 = vld [vmem:[#allocation11 + $0x540] sm:$0xff]
    %v795 = vld [vmem:[#allocation11 + $0x548] sm:$0xff]
    %v796 = vld [vmem:[#allocation11 + $0x550] sm:$0xff]
    %v797 = vld [vmem:[#allocation11 + $0x558] sm:$0xff]
    %v798 = vld [vmem:[#allocation11 + $0x560] sm:$0xff]
    %v799 = vld [vmem:[#allocation11 + $0x568] sm:$0xff]
    %v800 = vld [vmem:[#allocation11 + $0x570] sm:$0xff]
    %v801 = vld [vmem:[#allocation11 + $0x578] sm:$0xff]
    %v802 = vld [vmem:[#allocation11 + $0x580] sm:$0xff]
    %v803 = vld [vmem:[#allocation11 + $0x588] sm:$0xff]
    %v804 = vld [vmem:[#allocation11 + $0x590] sm:$0xff]
    %v805 = vld [vmem:[#allocation11 + $0x598] sm:$0xff]
    %v806 = vld [vmem:[#allocation11 + $0x5a0] sm:$0xff]
    %v807 = vld [vmem:[#allocation11 + $0x5a8] sm:$0xff]
    %v808 = vld [vmem:[#allocation11 + $0x5b0] sm:$0xff]
    %v809 = vld [vmem:[#allocation11 + $0x5b8] sm:$0xff]
    %v810 = vld [vmem:[#allocation11 + $0x5c0] sm:$0xff]
    %v811 = vld [vmem:[#allocation11 + $0x5c8] sm:$0xff]
    %v812 = vld [vmem:[#allocation11 + $0x5d0] sm:$0xff]
    %v813 = vld [vmem:[#allocation11 + $0x5d8] sm:$0xff]
    %v814 = vld [vmem:[#allocation11 + $0x5e0] sm:$0xff]
    %v815 = vld [vmem:[#allocation11 + $0x5e8] sm:$0xff]
    %v816 = vld [vmem:[#allocation11 + $0x5f0] sm:$0xff]
    %v817 = vld [vmem:[#allocation11 + $0x5f8] sm:$0xff]
    %v818 = vld [vmem:[#allocation11 + $0x600] sm:$0xff]
    %v819 = vld [vmem:[#allocation11 + $0x608] sm:$0xff]
    %v820 = vld [vmem:[#allocation11 + $0x610] sm:$0xff]
    %v821 = vld [vmem:[#allocation11 + $0x618] sm:$0xff]
    %v822 = vld [vmem:[#allocation11 + $0x620] sm:$0xff]
    %v823 = vld [vmem:[#allocation11 + $0x628] sm:$0xff]
    %v824 = vld [vmem:[#allocation11 + $0x630] sm:$0xff]
    %v825 = vld [vmem:[#allocation11 + $0x638] sm:$0xff]
    %v826 = vld [vmem:[#allocation11 + $0x640] sm:$0xff]
    %v827 = vld [vmem:[#allocation11 + $0x648] sm:$0xff]
    %v828 = vld [vmem:[#allocation11 + $0x650] sm:$0xff]
    %v829 = vld [vmem:[#allocation11 + $0x658] sm:$0xff]
    %v830 = vld [vmem:[#allocation11 + $0x660] sm:$0xff]
    %v831 = vld [vmem:[#allocation11 + $0x668] sm:$0xff]
    %v832 = vld [vmem:[#allocation11 + $0x670] sm:$0xff]
    %v833 = vld [vmem:[#allocation11 + $0x678] sm:$0xff]
    %v834 = vld [vmem:[#allocation11 + $0x680] sm:$0xff]
    %v835 = vld [vmem:[#allocation11 + $0x688] sm:$0xff]
    %v836 = vld [vmem:[#allocation11 + $0x690] sm:$0xff]
    %v837 = vld [vmem:[#allocation11 + $0x698] sm:$0xff]
    %v838 = vld [vmem:[#allocation11 + $0x6a0] sm:$0xff]
    %v839 = vld [vmem:[#allocation11 + $0x6a8] sm:$0xff]
    %v840 = vld [vmem:[#allocation11 + $0x6b0] sm:$0xff]
    %v841 = vld [vmem:[#allocation11 + $0x6b8] sm:$0xff]
    %v842 = vld [vmem:[#allocation11 + $0x6c0] sm:$0xff]
    %v843 = vld [vmem:[#allocation11 + $0x6c8] sm:$0xff]
    %v844 = vld [vmem:[#allocation11 + $0x6d0] sm:$0xff]
    %v845 = vld [vmem:[#allocation11 + $0x6d8] sm:$0xff]
    %v846 = vld [vmem:[#allocation11 + $0x6e0] sm:$0xff]
    %v847 = vld [vmem:[#allocation11 + $0x6e8] sm:$0xff]
    %v848 = vld [vmem:[#allocation11 + $0x6f0] sm:$0xff]
    %v849 = vld [vmem:[#allocation11 + $0x6f8] sm:$0xff]
    %v850 = vld [vmem:[#allocation11 + $0x700] sm:$0xff]
    %v851 = vld [vmem:[#allocation11 + $0x708] sm:$0xff]
    %v852 = vld [vmem:[#allocation11 + $0x710] sm:$0xff]
    %v853 = vld [vmem:[#allocation11 + $0x718] sm:$0xff]
    %v854 = vld [vmem:[#allocation11 + $0x720] sm:$0xff]
    %v855 = vld [vmem:[#allocation11 + $0x728] sm:$0xff]
    %v856 = vld [vmem:[#allocation11 + $0x730] sm:$0xff]
    %v857 = vld [vmem:[#allocation11 + $0x738] sm:$0xff]
    %v858 = vld [vmem:[#allocation11 + $0x740] sm:$0xff]
    %v859 = vld [vmem:[#allocation11 + $0x748] sm:$0xff]
    %v860 = vld [vmem:[#allocation11 + $0x750] sm:$0xff]
    %v861 = vld [vmem:[#allocation11 + $0x758] sm:$0xff]
    %v862 = vld [vmem:[#allocation11 + $0x760] sm:$0xff]
    %v863 = vld [vmem:[#allocation11 + $0x768] sm:$0xff]
    %v864 = vld [vmem:[#allocation11 + $0x770] sm:$0xff]
    %v865 = vld [vmem:[#allocation11 + $0x778] sm:$0xff]
    %v866 = vld [vmem:[#allocation11 + $0x780] sm:$0xff]
    %v867 = vld [vmem:[#allocation11 + $0x788] sm:$0xff]
    %v868 = vld [vmem:[#allocation11 + $0x790] sm:$0xff]
    %v869 = vld [vmem:[#allocation11 + $0x798] sm:$0xff]
    %v870 = vld [vmem:[#allocation11 + $0x7a0] sm:$0xff]
    %v871 = vld [vmem:[#allocation11 + $0x7a8] sm:$0xff]
    %v872 = vld [vmem:[#allocation11 + $0x7b0] sm:$0xff]
    %v873 = vld [vmem:[#allocation11 + $0x7b8] sm:$0xff]
    %v874 = vld [vmem:[#allocation11 + $0x7c0] sm:$0xff]
    %v875 = vld [vmem:[#allocation11 + $0x7c8] sm:$0xff]
    %v876 = vld [vmem:[#allocation11 + $0x7d0] sm:$0xff]
    %v877 = vld [vmem:[#allocation11 + $0x7d8] sm:$0xff]
    %v878 = vld [vmem:[#allocation11 + $0x7e0] sm:$0xff]
    %v879 = vld [vmem:[#allocation11 + $0x7e8] sm:$0xff]
    %v880 = vld [vmem:[#allocation11 + $0x7f0] sm:$0xff]
    %v881 = vld [vmem:[#allocation11 + $0x7f8] sm:$0xff]
    %v882 = vld [vmem:[#allocation11 + $0x800] sm:$0xff]
    %v883 = vld [vmem:[#allocation11 + $0x808] sm:$0xff]
    %v884 = vld [vmem:[#allocation11 + $0x810] sm:$0xff]
    %v885 = vld [vmem:[#allocation11 + $0x818] sm:$0xff]
    %v886 = vld [vmem:[#allocation11 + $0x820] sm:$0xff]
    %v887 = vld [vmem:[#allocation11 + $0x828] sm:$0xff]
    %v888 = vld [vmem:[#allocation11 + $0x830] sm:$0xff]
    %v889 = vld [vmem:[#allocation11 + $0x838] sm:$0xff]
    %v890 = vld [vmem:[#allocation11 + $0x840] sm:$0xff]
    %v891 = vld [vmem:[#allocation11 + $0x848] sm:$0xff]
    %v892 = vld [vmem:[#allocation11 + $0x850] sm:$0xff]
    %v893 = vld [vmem:[#allocation11 + $0x858] sm:$0xff]
    %v894 = vld [vmem:[#allocation11 + $0x860] sm:$0xff]
    %v895 = vld [vmem:[#allocation11 + $0x868] sm:$0xff]
    %v896 = vld [vmem:[#allocation11 + $0x870] sm:$0xff]
    %v897 = vld [vmem:[#allocation11 + $0x878] sm:$0xff]
    %v898 = vld [vmem:[#allocation11 + $0x880] sm:$0xff]
    %v899 = vld [vmem:[#allocation11 + $0x888] sm:$0xff]
    %v900 = vld [vmem:[#allocation11 + $0x890] sm:$0xff]
    %v901 = vld [vmem:[#allocation11 + $0x898] sm:$0xff]
    %v902 = vld [vmem:[#allocation11 + $0x8a0] sm:$0xff]
    %v903 = vld [vmem:[#allocation11 + $0x8a8] sm:$0xff]
    %v904 = vld [vmem:[#allocation11 + $0x8b0] sm:$0xff]
    %v905 = vld [vmem:[#allocation11 + $0x8b8] sm:$0xff]
    %v906 = vld [vmem:[#allocation11 + $0x8c0] sm:$0xff]
    %v907 = vld [vmem:[#allocation11 + $0x8c8] sm:$0xff]
    %v908 = vld [vmem:[#allocation11 + $0x8d0] sm:$0xff]
    %v909 = vld [vmem:[#allocation11 + $0x8d8] sm:$0xff]
    %v910 = vld [vmem:[#allocation11 + $0x8e0] sm:$0xff]
    %v911 = vld [vmem:[#allocation11 + $0x8e8] sm:$0xff]
    %v912 = vld [vmem:[#allocation11 + $0x8f0] sm:$0xff]
    %v913 = vld [vmem:[#allocation11 + $0x8f8] sm:$0xff]
    %v914 = vld [vmem:[#allocation11 + $0x900] sm:$0xff]
    %v915 = vld [vmem:[#allocation11 + $0x908] sm:$0xff]
    %v916 = vld [vmem:[#allocation11 + $0x910] sm:$0xff]
    %v917 = vld [vmem:[#allocation11 + $0x918] sm:$0xff]
    %v918 = vld [vmem:[#allocation11 + $0x920] sm:$0xff]
    %v919 = vld [vmem:[#allocation11 + $0x928] sm:$0xff]
    %v920 = vld [vmem:[#allocation11 + $0x930] sm:$0xff]
    %v921 = vld [vmem:[#allocation11 + $0x938] sm:$0xff]
    %v922 = vld [vmem:[#allocation11 + $0x940] sm:$0xff]
    %v923 = vld [vmem:[#allocation11 + $0x948] sm:$0xff]
    %v924 = vld [vmem:[#allocation11 + $0x950] sm:$0xff]
    %v925 = vld [vmem:[#allocation11 + $0x958] sm:$0xff]
    %v926 = vld [vmem:[#allocation11 + $0x960] sm:$0xff]
    %v927 = vld [vmem:[#allocation11 + $0x968] sm:$0xff]
    %v928 = vld [vmem:[#allocation11 + $0x970] sm:$0xff]
    %v929 = vld [vmem:[#allocation11 + $0x978] sm:$0xff]
    %v930 = vld [vmem:[#allocation11 + $0x980] sm:$0xff]
    %v931 = vld [vmem:[#allocation11 + $0x988] sm:$0xff]
    %v932 = vld [vmem:[#allocation11 + $0x990] sm:$0xff]
    %v933 = vld [vmem:[#allocation11 + $0x998] sm:$0xff]
    %v934 = vld [vmem:[#allocation11 + $0x9a0] sm:$0xff]
    %v935 = vld [vmem:[#allocation11 + $0x9a8] sm:$0xff]
    %v936 = vld [vmem:[#allocation11 + $0x9b0] sm:$0xff]
    %v937 = vld [vmem:[#allocation11 + $0x9b8] sm:$0xff]
    %v938 = vld [vmem:[#allocation11 + $0x9c0] sm:$0xff]
    %v939 = vld [vmem:[#allocation11 + $0x9c8] sm:$0xff]
    %v940 = vld [vmem:[#allocation11 + $0x9d0] sm:$0xff]
    %v941 = vld [vmem:[#allocation11 + $0x9d8] sm:$0xff]
    %v942 = vld [vmem:[#allocation11 + $0x9e0] sm:$0xff]
    %v943 = vld [vmem:[#allocation11 + $0x9e8] sm:$0xff]
    %v944 = vld [vmem:[#allocation11 + $0x9f0] sm:$0xff]
    %v945 = vld [vmem:[#allocation11 + $0x9f8] sm:$0xff]
    %v946 = vld [vmem:[#allocation11 + $0xa00] sm:$0xff]
    %v947 = vld [vmem:[#allocation11 + $0xa08] sm:$0xff]
    %v948 = vld [vmem:[#allocation11 + $0xa10] sm:$0xff]
    %v949 = vld [vmem:[#allocation11 + $0xa18] sm:$0xff]
    %v950 = vld [vmem:[#allocation11 + $0xa20] sm:$0xff]
    %v951 = vld [vmem:[#allocation11 + $0xa28] sm:$0xff]
    %v952 = vld [vmem:[#allocation11 + $0xa30] sm:$0xff]
    %v953 = vld [vmem:[#allocation11 + $0xa38] sm:$0xff]
    %v954 = vld [vmem:[#allocation11 + $0xa40] sm:$0xff]
    %v955 = vld [vmem:[#allocation11 + $0xa48] sm:$0xff]
    %v956 = vld [vmem:[#allocation11 + $0xa50] sm:$0xff]
    %v957 = vld [vmem:[#allocation11 + $0xa58] sm:$0xff]
    %v958 = vld [vmem:[#allocation11 + $0xa60] sm:$0xff]
    %v959 = vld [vmem:[#allocation11 + $0xa68] sm:$0xff]
    %v960 = vld [vmem:[#allocation11 + $0xa70] sm:$0xff]
    %v961 = vld [vmem:[#allocation11 + $0xa78] sm:$0xff]
    %v962 = vld [vmem:[#allocation11 + $0xa80] sm:$0xff]
    %v963 = vld [vmem:[#allocation11 + $0xa88] sm:$0xff]
    %v964 = vld [vmem:[#allocation11 + $0xa90] sm:$0xff]
    %v965 = vld [vmem:[#allocation11 + $0xa98] sm:$0xff]
    %v966 = vld [vmem:[#allocation11 + $0xaa0] sm:$0xff]
    %v967 = vld [vmem:[#allocation11 + $0xaa8] sm:$0xff]
    %v968 = vld [vmem:[#allocation11 + $0xab0] sm:$0xff]
    %v969 = vld [vmem:[#allocation11 + $0xab8] sm:$0xff]
    %v970 = vld [vmem:[#allocation11 + $0xac0] sm:$0xff]
    %v971 = vld [vmem:[#allocation11 + $0xac8] sm:$0xff]
    %v972 = vld [vmem:[#allocation11 + $0xad0] sm:$0xff]
    %v973 = vld [vmem:[#allocation11 + $0xad8] sm:$0xff]
    %v974 = vld [vmem:[#allocation11 + $0xae0] sm:$0xff]
    %v975 = vld [vmem:[#allocation11 + $0xae8] sm:$0xff]
    %v976 = vld [vmem:[#allocation11 + $0xaf0] sm:$0xff]
    %v977 = vld [vmem:[#allocation11 + $0xaf8] sm:$0xff]
    %v978 = vld [vmem:[#allocation11 + $0xb00] sm:$0xff]
    %v979 = vld [vmem:[#allocation11 + $0xb08] sm:$0xff]
    %v980 = vld [vmem:[#allocation11 + $0xb10] sm:$0xff]
    %v981 = vld [vmem:[#allocation11 + $0xb18] sm:$0xff]
    %v982 = vld [vmem:[#allocation11 + $0xb20] sm:$0xff]
    %v983 = vld [vmem:[#allocation11 + $0xb28] sm:$0xff]
    %v984 = vld [vmem:[#allocation11 + $0xb30] sm:$0xff]
    %v985 = vld [vmem:[#allocation11 + $0xb38] sm:$0xff]
    %v986 = vld [vmem:[#allocation11 + $0xb40] sm:$0xff]
    %v987 = vld [vmem:[#allocation11 + $0xb48] sm:$0xff]
    %v988 = vld [vmem:[#allocation11 + $0xb50] sm:$0xff]
    %v989 = vld [vmem:[#allocation11 + $0xb58] sm:$0xff]
    %v990 = vld [vmem:[#allocation11 + $0xb60] sm:$0xff]
    %v991 = vld [vmem:[#allocation11 + $0xb68] sm:$0xff]
    %v992 = vld [vmem:[#allocation11 + $0xb70] sm:$0xff]
    %v993 = vld [vmem:[#allocation11 + $0xb78] sm:$0xff]
    %v994 = vld [vmem:[#allocation11 + $0xb80] sm:$0xff]
    %v995 = vld [vmem:[#allocation11 + $0xb88] sm:$0xff]
    %v996 = vld [vmem:[#allocation11 + $0xb90] sm:$0xff]
    %v997 = vld [vmem:[#allocation11 + $0xb98] sm:$0xff]
    %v998 = vld [vmem:[#allocation11 + $0xba0] sm:$0xff]
    %v999 = vld [vmem:[#allocation11 + $0xba8] sm:$0xff]
    %v1000 = vld [vmem:[#allocation11 + $0xbb0] sm:$0xff]
    %v1001 = vld [vmem:[#allocation11 + $0xbb8] sm:$0xff]
    %v1002 = vld [vmem:[#allocation11 + $0xbc0] sm:$0xff]
    %v1003 = vld [vmem:[#allocation11 + $0xbc8] sm:$0xff]
    %v1004 = vld [vmem:[#allocation11 + $0xbd0] sm:$0xff]
    %v1005 = vld [vmem:[#allocation11 + $0xbd8] sm:$0xff]
    %v1006 = vld [vmem:[#allocation11 + $0xbe0] sm:$0xff]
    %v1007 = vld [vmem:[#allocation11 + $0xbe8] sm:$0xff]
    %v1008 = vld [vmem:[#allocation11 + $0xbf0] sm:$0xff]
    %v1009 = vld [vmem:[#allocation11 + $0xbf8] sm:$0xff]
    %v1010 = vld [vmem:[#allocation11 + $0xc00] sm:$0xff]
    %v1011 = vld [vmem:[#allocation11 + $0xc08] sm:$0xff]
    %v1012 = vld [vmem:[#allocation11 + $0xc10] sm:$0xff]
    %v1013 = vld [vmem:[#allocation11 + $0xc18] sm:$0xff]
    %v1014 = vld [vmem:[#allocation11 + $0xc20] sm:$0xff]
    %v1015 = vld [vmem:[#allocation11 + $0xc28] sm:$0xff]
    %v1016 = vld [vmem:[#allocation11 + $0xc30] sm:$0xff]
    %v1017 = vld [vmem:[#allocation11 + $0xc38] sm:$0xff]
    %v1018 = vld [vmem:[#allocation11 + $0xc40] sm:$0xff]
    %v1019 = vld [vmem:[#allocation11 + $0xc48] sm:$0xff]
    %v1020 = vld [vmem:[#allocation11 + $0xc50] sm:$0xff]
    %v1021 = vld [vmem:[#allocation11 + $0xc58] sm:$0xff]
    %v1022 = vld [vmem:[#allocation11 + $0xc60] sm:$0xff]
    %v1023 = vld [vmem:[#allocation11 + $0xc68] sm:$0xff]
    %v1024 = vld [vmem:[#allocation11 + $0xc70] sm:$0xff]
    %v1025 = vld [vmem:[#allocation11 + $0xc78] sm:$0xff]
    %v1026 = vld [vmem:[#allocation13] sm:$0x1f]
    %v1028 = vlaneseq
    %v1029 = vshrl.u32 %v1028, 7
    %v1030 = vsub.s32 0, %v1029
    %v1031 = vrot.slane %v1026, %v1030
    %v1032 = vlaneseq
    %v1033 = vshrl.u32 %v1032, 7
    %v1034 = vsub.s32 1, %v1033
    %v1035 = vrot.slane %v1026, %v1034
    %v1036 = vlaneseq
    %v1037 = vshrl.u32 %v1036, 7
    %v1038 = vsub.s32 2, %v1037
    %v1039 = vrot.slane %v1026, %v1038
    %v1040 = vlaneseq
    %v1041 = vshrl.u32 %v1040, 7
    %v1042 = vsub.s32 3, %v1041
    %v1043 = vrot.slane %v1026, %v1042
    %v1044 = vlaneseq
    %v1045 = vshrl.u32 %v1044, 7
    %v1046 = vsub.s32 4, %v1045
    %v1047 = vrot.slane %v1026, %v1046
    %1053 = vmatprep.subr.mxu0 %v627
    %1054 = vmatpush1.msra.mxu0 %v626
    %1055 = vmatprep.subr.mxu0 %v632
    %1056 = vmatpush1.msra.mxu0 %v631
    %1057 = vmatprep.subr.mxu0 %v637
    %1058 = vmatpush1.msra.mxu0 %v636
    %1059 = vmatprep.subr.mxu0 %v642
    %1060 = vmatpush1.msra.mxu0 %v641
    %1061 = vmatprep.subr.mxu0 %v647
    %1062 = vmatpush1.msra.mxu0 %v646
    %1063 = vmatprep.subr.mxu0 %v652
    %1064 = vmatpush1.msra.mxu0 %v651
    %1065 = vmatprep.subr.mxu0 %v657
    %1066 = vmatpush1.msra.mxu0 %v656
    %1067 = vmatprep.subr.mxu0 %v662
    %1068 = vmatpush1.msra.mxu0 %v661
    %1069 = vmatprep.subr.mxu0 %v667
    %1070 = vmatpush1.msra.mxu0 %v666
    %1071 = vmatprep.subr.mxu0 %v672
    %1072 = vmatpush1.msra.mxu0 %v671
    %1073 = vmatprep.subr.mxu0 %v677
    %1074 = vmatpush1.msra.mxu0 %v676
    %1075 = vmatprep.subr.mxu0 %v682
    %1076 = vmatpush1.msra.mxu0 %v681
    %1077 = vmatprep.subr.mxu0 %v687
    %1078 = vmatpush1.msra.mxu0 %v686
    %1079 = vmatprep.subr.mxu0 %v692
    %1080 = vmatpush1.msra.mxu0 %v691
    %1081 = vmatprep.subr.mxu0 %v697
    %1082 = vmatpush1.msra.mxu0 %v696
    %1083 = vmatprep.subr.mxu0 %v702
    %1084 = vmatpush1.msra.mxu0 %v701
    %1085 = vmatprep.subr.mxu0 %v707
    %1086 = vmatpush1.msra.mxu0 %v706
    %1087 = vmatprep.subr.mxu0 %v712
    %1088 = vmatpush1.msra.mxu0 %v711
    %1089 = vmatprep.subr.mxu0 %v717
    %1090 = vmatpush1.msra.mxu0 %v716
    %1091 = vmatprep.subr.mxu0 %v722
    %1092 = vmatpush1.msra.mxu0 %v721
    %1093 = vmatprep.subr.mxu0 %v727
    %1094 = vmatpush1.msra.mxu0 %v726
    %1095 = vmatprep.subr.mxu0 %v732
    %1096 = vmatpush1.msra.mxu0 %v731
    %1097 = vmatprep.subr.mxu0 %v737
    %1098 = vmatpush1.msra.mxu0 %v736
    %1099 = vmatprep.subr.mxu0 %v742
    %1100 = vmatpush1.msra.mxu0 %v741
    %1101 = vmatprep.subr.mxu0 %v747
    %1102 = vmatpush1.msra.mxu0 %v746
    %1103 = vmatprep.subr.mxu0 %v752
    %1104 = vmatpush1.msra.mxu0 %v751
    %1105 = vmatprep.subr.mxu0 %v757
    %1106 = vmatpush1.msra.mxu0 %v756
    %1107 = vmatprep.subr.mxu0 %v762
    %1108 = vmatpush1.msra.mxu0 %v761
    %1109 = vmatprep.subr.mxu0 %v767
    %1110 = vmatpush1.msra.mxu0 %v766
    %1111 = vmatprep.subr.mxu0 %v772
    %1112 = vmatpush1.msra.mxu0 %v771
    %1113 = vmatprep.subr.mxu0 %v777
    %1114 = vmatpush1.msra.mxu0 %v776
    %1115 = vmatprep.subr.mxu0 %v782
    %1116 = vmatpush1.msra.mxu0 %v781
    %1117 = vmatprep.mubr.f32.mxu0 %v617
    %1118 = vmatmul.mubr.f32.gmra.mrb[0].mxu0 %v616
    %v1119 = vpop.f32.mrb[0].mxu0
    %v1120 = vadd.f32 %v1031, %v1119
    %v1121 = vpop.f32.mrb[0].mxu0
    %v1122 = vadd.f32 %v1035, %v1121
    %1123 = vmatprep.mubr.f32.mxu0 %v622
    %1124 = vmatmul.mubr.f32.gmra.mrb[0].mxu0 %v621
    %v1125 = vpop.f32.mrb[0].mxu0
    %v1126 = vadd.f32 %v1031, %v1125
    %v1127 = vpop.f32.mrb[0].mxu0
    %v1128 = vadd.f32 %v1035, %v1127
    %1129 = vdwg.mxu0
    %1130 = vmatprep.subr.mxu0 %v787
    %1131 = vmatpush1.msra.mxu0 %v786
    %1132 = vmatprep.subr.mxu0 %v792
    %1133 = vmatpush1.msra.mxu0 %v791
    %1134 = vmatprep.subr.mxu0 %v797
    %1135 = vmatpush1.msra.mxu0 %v796
    %1136 = vmatprep.subr.mxu0 %v802
    %1137 = vmatpush1.msra.mxu0 %v801
    %1138 = vmatprep.subr.mxu0 %v807
    %1139 = vmatpush1.msra.mxu0 %v806
    %1140 = vmatprep.subr.mxu0 %v812
    %1141 = vmatpush1.msra.mxu0 %v811
    %1142 = vmatprep.subr.mxu0 %v817
    %1143 = vmatpush1.msra.mxu0 %v816
    %1144 = vmatprep.subr.mxu0 %v822
    %1145 = vmatpush1.msra.mxu0 %v821
    %1146 = vmatprep.subr.mxu0 %v827
    %1147 = vmatpush1.msra.mxu0 %v826
    %1148 = vmatprep.subr.mxu0 %v832
    %1149 = vmatpush1.msra.mxu0 %v831
    %1150 = vmatprep.subr.mxu0 %v837
    %1151 = vmatpush1.msra.mxu0 %v836
    %1152 = vmatprep.subr.mxu0 %v842
    %1153 = vmatpush1.msra.mxu0 %v841
    %1154 = vmatprep.subr.mxu0 %v847
    %1155 = vmatpush1.msra.mxu0 %v846
    %1156 = vmatprep.subr.mxu0 %v852
    %1157 = vmatpush1.msra.mxu0 %v851
    %1158 = vmatprep.subr.mxu0 %v857
    %1159 = vmatpush1.msra.mxu0 %v856
    %1160 = vmatprep.subr.mxu0 %v862
    %1161 = vmatpush1.msra.mxu0 %v861
    %1162 = vmatprep.subr.mxu0 %v867
    %1163 = vmatpush1.msra.mxu0 %v866
    %1164 = vmatprep.subr.mxu0 %v872
    %1165 = vmatpush1.msra.mxu0 %v871
    %1166 = vmatprep.subr.mxu0 %v877
    %1167 = vmatpush1.msra.mxu0 %v876
    %1168 = vmatprep.subr.mxu0 %v882
    %1169 = vmatpush1.msra.mxu0 %v881
    %1170 = vmatprep.subr.mxu0 %v887
    %1171 = vmatpush1.msra.mxu0 %v886
    %1172 = vmatprep.subr.mxu0 %v892
    %1173 = vmatpush1.msra.mxu0 %v891
    %1174 = vmatprep.subr.mxu0 %v897
    %1175 = vmatpush1.msra.mxu0 %v896
    %1176 = vmatprep.subr.mxu0 %v902
    %1177 = vmatpush1.msra.mxu0 %v901
    %1178 = vmatprep.subr.mxu0 %v907
    %1179 = vmatpush1.msra.mxu0 %v906
    %1180 = vmatprep.subr.mxu0 %v912
    %1181 = vmatpush1.msra.mxu0 %v911
    %1182 = vmatprep.subr.mxu0 %v917
    %1183 = vmatpush1.msra.mxu0 %v916
    %1184 = vmatprep.subr.mxu0 %v922
    %1185 = vmatpush1.msra.mxu0 %v921
    %1186 = vmatprep.subr.mxu0 %v927
    %1187 = vmatpush1.msra.mxu0 %v926
    %1188 = vmatprep.subr.mxu0 %v932
    %1189 = vmatpush1.msra.mxu0 %v931
    %1190 = vmatprep.subr.mxu0 %v937
    %1191 = vmatpush1.msra.mxu0 %v936
    %1192 = vmatprep.subr.mxu0 %v942
    %1193 = vmatpush1.msra.mxu0 %v941
    %1194 = vmatprep.mubr.f32.mxu0 %v619
    %1195 = vmatmul.mubr.f32.gmra.mrb[0].mxu0 %v618
    %v1196 = vpop.f32.mrb[0].mxu0
    %v1197 = vadd.f32 %v1120, %v1196
    %v1198 = vpop.f32.mrb[0].mxu0
    %v1199 = vadd.f32 %v1122, %v1198
    %1200 = vmatprep.mubr.f32.mxu0 %v624
    %1201 = vmatmul.mubr.f32.gmra.mrb[0].mxu0 %v623
    %v1202 = vpop.f32.mrb[0].mxu0
    %v1203 = vadd.f32 %v1126, %v1202
    %v1204 = vpop.f32.mrb[0].mxu0
    %v1205 = vadd.f32 %v1128, %v1204
    %1206 = vdwg.mxu0
    %1207 = vmatprep.subr.mxu0 %v947
    %1208 = vmatpush1.msra.mxu0 %v946
    %1209 = vmatprep.subr.mxu0 %v952
    %1210 = vmatpush1.msra.mxu0 %v951
    %1211 = vmatprep.subr.mxu0 %v957
    %1212 = vmatpush1.msra.mxu0 %v956
    %1213 = vmatprep.subr.mxu0 %v962
    %1214 = vmatpush1.msra.mxu0 %v961
    %1215 = vmatprep.subr.mxu0 %v967
    %1216 = vmatpush1.msra.mxu0 %v966
    %1217 = vmatprep.subr.mxu0 %v972
    %1218 = vmatpush1.msra.mxu0 %v971
    %1219 = vmatprep.subr.mxu0 %v977
    %1220 = vmatpush1.msra.mxu0 %v976
    %1221 = vmatprep.subr.mxu0 %v982
    %1222 = vmatpush1.msra.mxu0 %v981
    %1223 = vmatprep.subr.mxu0 %v987
    %1224 = vmatpush1.msra.mxu0 %v986
    %1225 = vmatprep.subr.mxu0 %v992
    %1226 = vmatpush1.msra.mxu0 %v991
    %1227 = vmatprep.subr.mxu0 %v997
    %1228 = vmatpush1.msra.mxu0 %v996
    %1229 = vmatprep.subr.mxu0 %v1002
    %1230 = vmatpush1.msra.mxu0 %v1001
    %1231 = vmatprep.subr.mxu0 %v1007
    %1232 = vmatpush1.msra.mxu0 %v1006
    %1233 = vmatprep.subr.mxu0 %v1012
    %1234 = vmatpush1.msra.mxu0 %v1011
    %1235 = vmatprep.subr.mxu0 %v1017
    %1236 = vmatpush1.msra.mxu0 %v1016
    %1237 = vmatprep.subr.mxu0 %v1022
    %1238 = vmatpush1.msra.mxu0 %v1021
    %1239 = vmatprep.subr.mxu0 0.0
    %1240 = vmatpush1.msra.mxu0 0.0
    %1241 = vmatprep.subr.mxu0 0.0
    %1242 = vmatpush1.msra.mxu0 0.0
    %1243 = vmatprep.subr.mxu0 0.0
    %1244 = vmatpush1.msra.mxu0 0.0
    %1245 = vmatprep.subr.mxu0 0.0
    %1246 = vmatpush1.msra.mxu0 0.0
    %1247 = vmatprep.subr.mxu0 0.0
    %1248 = vmatpush1.msra.mxu0 0.0
    %1249 = vmatprep.subr.mxu0 0.0
    %1250 = vmatpush1.msra.mxu0 0.0
    %1251 = vmatprep.subr.mxu0 0.0
    %1252 = vmatpush1.msra.mxu0 0.0
    %1253 = vmatprep.subr.mxu0 0.0
    %1254 = vmatpush1.msra.mxu0 0.0
    %1255 = vmatprep.subr.mxu0 0.0
    %1256 = vmatpush1.msra.mxu0 0.0
    %1257 = vmatprep.subr.mxu0 0.0
    %1258 = vmatpush1.msra.mxu0 0.0
    %1259 = vmatprep.subr.mxu0 0.0
    %1260 = vmatpush1.msra.mxu0 0.0
    %1261 = vmatprep.subr.mxu0 0.0
    %1262 = vmatpush1.msra.mxu0 0.0
    %1263 = vmatprep.subr.mxu0 0.0
    %1264 = vmatpush1.msra.mxu0 0.0
    %1265 = vmatprep.subr.mxu0 0.0
    %1266 = vmatpush1.msra.mxu0 0.0
    %1267 = vmatprep.subr.mxu0 0.0
    %1268 = vmatpush1.msra.mxu0 0.0
    %1269 = vmatprep.subr.mxu0 0.0
    %1270 = vmatpush1.msra.mxu0 0.0
    %1271 = vmatprep.mubr.f32.mxu0 0.0
    %1272 = vmatmul.mubr.f32.gmra.mrb[0].mxu0 %v620
    %v1273 = vpop.f32.mrb[0].mxu0
    %v1274 = vadd.f32 %v1197, %v1273
    %v1275 = vpop.f32.mrb[0].mxu0
    %v1276 = vadd.f32 %v1199, %v1275
    %1277 = vmatprep.mubr.f32.mxu0 0.0
    %1278 = vmatmul.mubr.f32.gmra.mrb[0].mxu0 %v625
    %v1279 = vpop.f32.mrb[0].mxu0
    %v1280 = vadd.f32 %v1203, %v1279
    %v1281 = vpop.f32.mrb[0].mxu0
    %v1282 = vadd.f32 %v1205, %v1281
    %1283 = vdwg.mxu0
    %1284 = vmatprep.subr.mxu0 %v629
    %1285 = vmatpush1.msra.mxu0 %v628
    %1286 = vmatprep.subr.mxu0 %v634
    %1287 = vmatpush1.msra.mxu0 %v633
    %1288 = vmatprep.subr.mxu0 %v639
    %1289 = vmatpush1.msra.mxu0 %v638
    %1290 = vmatprep.subr.mxu0 %v644
    %1291 = vmatpush1.msra.mxu0 %v643
    %1292 = vmatprep.subr.mxu0 %v649
    %1293 = vmatpush1.msra.mxu0 %v648
    %1294 = vmatprep.subr.mxu0 %v654
    %1295 = vmatpush1.msra.mxu0 %v653
    %1296 = vmatprep.subr.mxu0 %v659
    %1297 = vmatpush1.msra.mxu0 %v658
    %1298 = vmatprep.subr.mxu0 %v664
    %1299 = vmatpush1.msra.mxu0 %v663
    %1300 = vmatprep.subr.mxu0 %v669
    %1301 = vmatpush1.msra.mxu0 %v668
    %1302 = vmatprep.subr.mxu0 %v674
    %1303 = vmatpush1.msra.mxu0 %v673
    %1304 = vmatprep.subr.mxu0 %v679
    %1305 = vmatpush1.msra.mxu0 %v678
    %1306 = vmatprep.subr.mxu0 %v684
    %1307 = vmatpush1.msra.mxu0 %v683
    %1308 = vmatprep.subr.mxu0 %v689
    %1309 = vmatpush1.msra.mxu0 %v688
    %1310 = vmatprep.subr.mxu0 %v694
    %1311 = vmatpush1.msra.mxu0 %v693
    %1312 = vmatprep.subr.mxu0 %v699
    %1313 = vmatpush1.msra.mxu0 %v698
    %1314 = vmatprep.subr.mxu0 %v704
    %1315 = vmatpush1.msra.mxu0 %v703
    %1316 = vmatprep.subr.mxu0 %v709
    %1317 = vmatpush1.msra.mxu0 %v708
    %1318 = vmatprep.subr.mxu0 %v714
    %1319 = vmatpush1.msra.mxu0 %v713
    %1320 = vmatprep.subr.mxu0 %v719
    %1321 = vmatpush1.msra.mxu0 %v718
    %1322 = vmatprep.subr.mxu0 %v724
    %1323 = vmatpush1.msra.mxu0 %v723
    %1324 = vmatprep.subr.mxu0 %v729
    %1325 = vmatpush1.msra.mxu0 %v728
    %1326 = vmatprep.subr.mxu0 %v734
    %1327 = vmatpush1.msra.mxu0 %v733
    %1328 = vmatprep.subr.mxu0 %v739
    %1329 = vmatpush1.msra.mxu0 %v738
    %1330 = vmatprep.subr.mxu0 %v744
    %1331 = vmatpush1.msra.mxu0 %v743
    %1332 = vmatprep.subr.mxu0 %v749
    %1333 = vmatpush1.msra.mxu0 %v748
    %1334 = vmatprep.subr.mxu0 %v754
    %1335 = vmatpush1.msra.mxu0 %v753
    %1336 = vmatprep.subr.mxu0 %v759
    %1337 = vmatpush1.msra.mxu0 %v758
    %1338 = vmatprep.subr.mxu0 %v764
    %1339 = vmatpush1.msra.mxu0 %v763
    %1340 = vmatprep.subr.mxu0 %v769
    %1341 = vmatpush1.msra.mxu0 %v768
    %1342 = vmatprep.subr.mxu0 %v774
    %1343 = vmatpush1.msra.mxu0 %v773
    %1344 = vmatprep.subr.mxu0 %v779
    %1345 = vmatpush1.msra.mxu0 %v778
    %1346 = vmatprep.subr.mxu0 %v784
    %1347 = vmatpush1.msra.mxu0 %v783
    %1348 = vmatprep.mubr.f32.mxu0 %v617
    %1349 = vmatmul.mubr.f32.gmra.mrb[0].mxu0 %v616
    %v1350 = vpop.f32.mrb[0].mxu0
    %v1351 = vadd.f32 %v1039, %v1350
    %v1352 = vpop.f32.mrb[0].mxu0
    %v1353 = vadd.f32 %v1043, %v1352
    %1354 = vmatprep.mubr.f32.mxu0 %v622
    %1355 = vmatmul.mubr.f32.gmra.mrb[0].mxu0 %v621
    %v1356 = vpop.f32.mrb[0].mxu0
    %v1357 = vadd.f32 %v1039, %v1356
    %v1358 = vpop.f32.mrb[0].mxu0
    %v1359 = vadd.f32 %v1043, %v1358
    %1360 = vdwg.mxu0
    %1361 = vmatprep.subr.mxu0 %v789
    %1362 = vmatpush1.msra.mxu0 %v788
    %1363 = vmatprep.subr.mxu0 %v794
    %1364 = vmatpush1.msra.mxu0 %v793
    %1365 = vmatprep.subr.mxu0 %v799
    %1366 = vmatpush1.msra.mxu0 %v798
    %1367 = vmatprep.subr.mxu0 %v804
    %1368 = vmatpush1.msra.mxu0 %v803
    %1369 = vmatprep.subr.mxu0 %v809
    %1370 = vmatpush1.msra.mxu0 %v808
    %1371 = vmatprep.subr.mxu0 %v814
    %1372 = vmatpush1.msra.mxu0 %v813
    %1373 = vmatprep.subr.mxu0 %v819
    %1374 = vmatpush1.msra.mxu0 %v818
    %1375 = vmatprep.subr.mxu0 %v824
    %1376 = vmatpush1.msra.mxu0 %v823
    %1377 = vmatprep.subr.mxu0 %v829
    %1378 = vmatpush1.msra.mxu0 %v828
    %1379 = vmatprep.subr.mxu0 %v834
    %1380 = vmatpush1.msra.mxu0 %v833
    %1381 = vmatprep.subr.mxu0 %v839
    %1382 = vmatpush1.msra.mxu0 %v838
    %1383 = vmatprep.subr.mxu0 %v844
    %1384 = vmatpush1.msra.mxu0 %v843
    %1385 = vmatprep.subr.mxu0 %v849
    %1386 = vmatpush1.msra.mxu0 %v848
    %1387 = vmatprep.subr.mxu0 %v854
    %1388 = vmatpush1.msra.mxu0 %v853
    %1389 = vmatprep.subr.mxu0 %v859
    %1390 = vmatpush1.msra.mxu0 %v858
    %1391 = vmatprep.subr.mxu0 %v864
    %1392 = vmatpush1.msra.mxu0 %v863
    %1393 = vmatprep.subr.mxu0 %v869
    %1394 = vmatpush1.msra.mxu0 %v868
    %1395 = vmatprep.subr.mxu0 %v874
    %1396 = vmatpush1.msra.mxu0 %v873
    %1397 = vmatprep.subr.mxu0 %v879
    %1398 = vmatpush1.msra.mxu0 %v878
    %1399 = vmatprep.subr.mxu0 %v884
    %1400 = vmatpush1.msra.mxu0 %v883
    %1401 = vmatprep.subr.mxu0 %v889
    %1402 = vmatpush1.msra.mxu0 %v888
    %1403 = vmatprep.subr.mxu0 %v894
    %1404 = vmatpush1.msra.mxu0 %v893
    %1405 = vmatprep.subr.mxu0 %v899
    %1406 = vmatpush1.msra.mxu0 %v898
    %1407 = vmatprep.subr.mxu0 %v904
    %1408 = vmatpush1.msra.mxu0 %v903
    %1409 = vmatprep.subr.mxu0 %v909
    %1410 = vmatpush1.msra.mxu0 %v908
    %1411 = vmatprep.subr.mxu0 %v914
    %1412 = vmatpush1.msra.mxu0 %v913
    %1413 = vmatprep.subr.mxu0 %v919
    %1414 = vmatpush1.msra.mxu0 %v918
    %1415 = vmatprep.subr.mxu0 %v924
    %1416 = vmatpush1.msra.mxu0 %v923
    %1417 = vmatprep.subr.mxu0 %v929
    %1418 = vmatpush1.msra.mxu0 %v928
    %1419 = vmatprep.subr.mxu0 %v934
    %1420 = vmatpush1.msra.mxu0 %v933
    %1421 = vmatprep.subr.mxu0 %v939
    %1422 = vmatpush1.msra.mxu0 %v938
    %1423 = vmatprep.subr.mxu0 %v944
    %1424 = vmatpush1.msra.mxu0 %v943
    %1425 = vmatprep.mubr.f32.mxu0 %v619
    %1426 = vmatmul.mubr.f32.gmra.mrb[0].mxu0 %v618
    %v1427 = vpop.f32.mrb[0].mxu0
    %v1428 = vadd.f32 %v1351, %v1427
    %v1429 = vpop.f32.mrb[0].mxu0
    %v1430 = vadd.f32 %v1353, %v1429
    %1431 = vmatprep.mubr.f32.mxu0 %v624
    %1432 = vmatmul.mubr.f32.gmra.mrb[0].mxu0 %v623
    %v1433 = vpop.f32.mrb[0].mxu0
    %v1434 = vadd.f32 %v1357, %v1433
    %v1435 = vpop.f32.mrb[0].mxu0
    %v1436 = vadd.f32 %v1359, %v1435
    %1437 = vdwg.mxu0
    %1438 = vmatprep.subr.mxu0 %v949
    %1439 = vmatpush1.msra.mxu0 %v948
    %1440 = vmatprep.subr.mxu0 %v954
    %1441 = vmatpush1.msra.mxu0 %v953
    %1442 = vmatprep.subr.mxu0 %v959
    %1443 = vmatpush1.msra.mxu0 %v958
    %1444 = vmatprep.subr.mxu0 %v964
    %1445 = vmatpush1.msra.mxu0 %v963
    %1446 = vmatprep.subr.mxu0 %v969
    %1447 = vmatpush1.msra.mxu0 %v968
    %1448 = vmatprep.subr.mxu0 %v974
    %1449 = vmatpush1.msra.mxu0 %v973
    %1450 = vmatprep.subr.mxu0 %v979
    %1451 = vmatpush1.msra.mxu0 %v978
    %1452 = vmatprep.subr.mxu0 %v984
    %1453 = vmatpush1.msra.mxu0 %v983
    %1454 = vmatprep.subr.mxu0 %v989
    %1455 = vmatpush1.msra.mxu0 %v988
    %1456 = vmatprep.subr.mxu0 %v994
    %1457 = vmatpush1.msra.mxu0 %v993
    %1458 = vmatprep.subr.mxu0 %v999
    %1459 = vmatpush1.msra.mxu0 %v998
    %1460 = vmatprep.subr.mxu0 %v1004
    %1461 = vmatpush1.msra.mxu0 %v1003
    %1462 = vmatprep.subr.mxu0 %v1009
    %1463 = vmatpush1.msra.mxu0 %v1008
    %1464 = vmatprep.subr.mxu0 %v1014
    %1465 = vmatpush1.msra.mxu0 %v1013
    %1466 = vmatprep.subr.mxu0 %v1019
    %1467 = vmatpush1.msra.mxu0 %v1018
    %1468 = vmatprep.subr.mxu0 %v1024
    %1469 = vmatpush1.msra.mxu0 %v1023
    %1470 = vmatprep.subr.mxu0 0.0
    %1471 = vmatpush1.msra.mxu0 0.0
    %1472 = vmatprep.subr.mxu0 0.0
    %1473 = vmatpush1.msra.mxu0 0.0
    %1474 = vmatprep.subr.mxu0 0.0
    %1475 = vmatpush1.msra.mxu0 0.0
    %1476 = vmatprep.subr.mxu0 0.0
    %1477 = vmatpush1.msra.mxu0 0.0
    %1478 = vmatprep.subr.mxu0 0.0
    %1479 = vmatpush1.msra.mxu0 0.0
    %1480 = vmatprep.subr.mxu0 0.0
    %1481 = vmatpush1.msra.mxu0 0.0
    %1482 = vmatprep.subr.mxu0 0.0
    %1483 = vmatpush1.msra.mxu0 0.0
    %1484 = vmatprep.subr.mxu0 0.0
    %1485 = vmatpush1.msra.mxu0 0.0
    %1486 = vmatprep.subr.mxu0 0.0
    %1487 = vmatpush1.msra.mxu0 0.0
    %1488 = vmatprep.subr.mxu0 0.0
    %1489 = vmatpush1.msra.mxu0 0.0
    %1490 = vmatprep.subr.mxu0 0.0
    %1491 = vmatpush1.msra.mxu0 0.0
    %1492 = vmatprep.subr.mxu0 0.0
    %1493 = vmatpush1.msra.mxu0 0.0
    %1494 = vmatprep.subr.mxu0 0.0
    %1495 = vmatpush1.msra.mxu0 0.0
    %1496 = vmatprep.subr.mxu0 0.0
    %1497 = vmatpush1.msra.mxu0 0.0
    %1498 = vmatprep.subr.mxu0 0.0
    %1499 = vmatpush1.msra.mxu0 0.0
    %1500 = vmatprep.subr.mxu0 0.0
    %1501 = vmatpush1.msra.mxu0 0.0
    %1502 = vmatprep.mubr.f32.mxu0 0.0
    %1503 = vmatmul.mubr.f32.gmra.mrb[0].mxu0 %v620
    %v1504 = vpop.f32.mrb[0].mxu0
    %v1505 = vadd.f32 %v1428, %v1504
    %v1506 = vpop.f32.mrb[0].mxu0
    %v1507 = vadd.f32 %v1430, %v1506
    %1508 = vmatprep.mubr.f32.mxu0 0.0
    %1509 = vmatmul.mubr.f32.gmra.mrb[0].mxu0 %v625
    %v1510 = vpop.f32.mrb[0].mxu0
    %v1511 = vadd.f32 %v1434, %v1510
    %v1512 = vpop.f32.mrb[0].mxu0
    %v1513 = vadd.f32 %v1436, %v1512
    %1514 = vdwg.mxu0
    %1515 = vmatprep.subr.mxu0 0.0
    %1516 = vmatpush1.msra.mxu0 %v630
    %1517 = vmatprep.subr.mxu0 0.0
    %1518 = vmatpush1.msra.mxu0 %v635
    %1519 = vmatprep.subr.mxu0 0.0
    %1520 = vmatpush1.msra.mxu0 %v640
    %1521 = vmatprep.subr.mxu0 0.0
    %1522 = vmatpush1.msra.mxu0 %v645
    %1523 = vmatprep.subr.mxu0 0.0
    %1524 = vmatpush1.msra.mxu0 %v650
    %1525 = vmatprep.subr.mxu0 0.0
    %1526 = vmatpush1.msra.mxu0 %v655
    %1527 = vmatprep.subr.mxu0 0.0
    %1528 = vmatpush1.msra.mxu0 %v660
    %1529 = vmatprep.subr.mxu0 0.0
    %1530 = vmatpush1.msra.mxu0 %v665
    %1531 = vmatprep.subr.mxu0 0.0
    %1532 = vmatpush1.msra.mxu0 %v670
    %1533 = vmatprep.subr.mxu0 0.0
    %1534 = vmatpush1.msra.mxu0 %v675
    %1535 = vmatprep.subr.mxu0 0.0
    %1536 = vmatpush1.msra.mxu0 %v680
    %1537 = vmatprep.subr.mxu0 0.0
    %1538 = vmatpush1.msra.mxu0 %v685
    %1539 = vmatprep.subr.mxu0 0.0
    %1540 = vmatpush1.msra.mxu0 %v690
    %1541 = vmatprep.subr.mxu0 0.0
    %1542 = vmatpush1.msra.mxu0 %v695
    %1543 = vmatprep.subr.mxu0 0.0
    %1544 = vmatpush1.msra.mxu0 %v700
    %1545 = vmatprep.subr.mxu0 0.0
    %1546 = vmatpush1.msra.mxu0 %v705
    %1547 = vmatprep.subr.mxu0 0.0
    %1548 = vmatpush1.msra.mxu0 %v710
    %1549 = vmatprep.subr.mxu0 0.0
    %1550 = vmatpush1.msra.mxu0 %v715
    %1551 = vmatprep.subr.mxu0 0.0
    %1552 = vmatpush1.msra.mxu0 %v720
    %1553 = vmatprep.subr.mxu0 0.0
    %1554 = vmatpush1.msra.mxu0 %v725
    %1555 = vmatprep.subr.mxu0 0.0
    %1556 = vmatpush1.msra.mxu0 %v730
    %1557 = vmatprep.subr.mxu0 0.0
    %1558 = vmatpush1.msra.mxu0 %v735
    %1559 = vmatprep.subr.mxu0 0.0
    %1560 = vmatpush1.msra.mxu0 %v740
    %1561 = vmatprep.subr.mxu0 0.0
    %1562 = vmatpush1.msra.mxu0 %v745
    %1563 = vmatprep.subr.mxu0 0.0
    %1564 = vmatpush1.msra.mxu0 %v750
    %1565 = vmatprep.subr.mxu0 0.0
    %1566 = vmatpush1.msra.mxu0 %v755
    %1567 = vmatprep.subr.mxu0 0.0
    %1568 = vmatpush1.msra.mxu0 %v760
    %1569 = vmatprep.subr.mxu0 0.0
    %1570 = vmatpush1.msra.mxu0 %v765
    %1571 = vmatprep.subr.mxu0 0.0
    %1572 = vmatpush1.msra.mxu0 %v770
    %1573 = vmatprep.subr.mxu0 0.0
    %1574 = vmatpush1.msra.mxu0 %v775
    %1575 = vmatprep.subr.mxu0 0.0
    %1576 = vmatpush1.msra.mxu0 %v780
    %1577 = vmatprep.subr.mxu0 0.0
    %1578 = vmatpush1.msra.mxu0 %v785
    %1579 = vmatprep.mubr.f32.mxu0 %v617
    %1580 = vmatmul.mubr.f32.gmra.mrb[0].mxu0 %v616
    %v1581 = vpop.f32.mrb[0].mxu0
    %v1582 = vadd.f32 %v1047, %v1581
    %v1583 = vpop.f32.mrb[0].mxu0
    %1584 = vmatprep.mubr.f32.mxu0 %v622
    %1585 = vmatmul.mubr.f32.gmra.mrb[0].mxu0 %v621
    %v1586 = vpop.f32.mrb[0].mxu0
    %v1587 = vadd.f32 %v1047, %v1586
    %v1588 = vpop.f32.mrb[0].mxu0
    %1589 = vdwg.mxu0
    %1590 = vmatprep.subr.mxu0 0.0
    %1591 = vmatpush1.msra.mxu0 %v790
    %1592 = vmatprep.subr.mxu0 0.0
    %1593 = vmatpush1.msra.mxu0 %v795
    %1594 = vmatprep.subr.mxu0 0.0
    %1595 = vmatpush1.msra.mxu0 %v800
    %1596 = vmatprep.subr.mxu0 0.0
    %1597 = vmatpush1.msra.mxu0 %v805
    %1598 = vmatprep.subr.mxu0 0.0
    %1599 = vmatpush1.msra.mxu0 %v810
    %1600 = vmatprep.subr.mxu0 0.0
    %1601 = vmatpush1.msra.mxu0 %v815
    %1602 = vmatprep.subr.mxu0 0.0
    %1603 = vmatpush1.msra.mxu0 %v820
    %1604 = vmatprep.subr.mxu0 0.0
    %1605 = vmatpush1.msra.mxu0 %v825
    %1606 = vmatprep.subr.mxu0 0.0
    %1607 = vmatpush1.msra.mxu0 %v830
    %1608 = vmatprep.subr.mxu0 0.0
    %1609 = vmatpush1.msra.mxu0 %v835
    %1610 = vmatprep.subr.mxu0 0.0
    %1611 = vmatpush1.msra.mxu0 %v840
    %1612 = vmatprep.subr.mxu0 0.0
    %1613 = vmatpush1.msra.mxu0 %v845
    %1614 = vmatprep.subr.mxu0 0.0
    %1615 = vmatpush1.msra.mxu0 %v850
    %1616 = vmatprep.subr.mxu0 0.0
    %1617 = vmatpush1.msra.mxu0 %v855
    %1618 = vmatprep.subr.mxu0 0.0
    %1619 = vmatpush1.msra.mxu0 %v860
    %1620 = vmatprep.subr.mxu0 0.0
    %1621 = vmatpush1.msra.mxu0 %v865
    %1622 = vmatprep.subr.mxu0 0.0
    %1623 = vmatpush1.msra.mxu0 %v870
    %1624 = vmatprep.subr.mxu0 0.0
    %1625 = vmatpush1.msra.mxu0 %v875
    %1626 = vmatprep.subr.mxu0 0.0
    %1627 = vmatpush1.msra.mxu0 %v880
    %1628 = vmatprep.subr.mxu0 0.0
    %1629 = vmatpush1.msra.mxu0 %v885
    %1630 = vmatprep.subr.mxu0 0.0
    %1631 = vmatpush1.msra.mxu0 %v890
    %1632 = vmatprep.subr.mxu0 0.0
    %1633 = vmatpush1.msra.mxu0 %v895
    %1634 = vmatprep.subr.mxu0 0.0
    %1635 = vmatpush1.msra.mxu0 %v900
    %1636 = vmatprep.subr.mxu0 0.0
    %1637 = vmatpush1.msra.mxu0 %v905
    %1638 = vmatprep.subr.mxu0 0.0
    %1639 = vmatpush1.msra.mxu0 %v910
    %1640 = vmatprep.subr.mxu0 0.0
    %1641 = vmatpush1.msra.mxu0 %v915
    %1642 = vmatprep.subr.mxu0 0.0
    %1643 = vmatpush1.msra.mxu0 %v920
    %1644 = vmatprep.subr.mxu0 0.0
    %1645 = vmatpush1.msra.mxu0 %v925
    %1646 = vmatprep.subr.mxu0 0.0
    %1647 = vmatpush1.msra.mxu0 %v930
    %1648 = vmatprep.subr.mxu0 0.0
    %1649 = vmatpush1.msra.mxu0 %v935
    %1650 = vmatprep.subr.mxu0 0.0
    %1651 = vmatpush1.msra.mxu0 %v940
    %1652 = vmatprep.subr.mxu0 0.0
    %1653 = vmatpush1.msra.mxu0 %v945
    %1654 = vmatprep.mubr.f32.mxu0 %v619
    %1655 = vmatmul.mubr.f32.gmra.mrb[0].mxu0 %v618
    %v1656 = vpop.f32.mrb[0].mxu0
    %v1657 = vadd.f32 %v1582, %v1656
    %v1658 = vpop.f32.mrb[0].mxu0
    %1659 = vmatprep.mubr.f32.mxu0 %v624
    %1660 = vmatmul.mubr.f32.gmra.mrb[0].mxu0 %v623
    %v1661 = vpop.f32.mrb[0].mxu0
    %v1662 = vadd.f32 %v1587, %v1661
    %v1663 = vpop.f32.mrb[0].mxu0
    %1664 = vdwg.mxu0
    %1665 = vmatprep.subr.mxu0 0.0
    %1666 = vmatpush1.msra.mxu0 %v950
    %1667 = vmatprep.subr.mxu0 0.0
    %1668 = vmatpush1.msra.mxu0 %v955
    %1669 = vmatprep.subr.mxu0 0.0
    %1670 = vmatpush1.msra.mxu0 %v960
    %1671 = vmatprep.subr.mxu0 0.0
    %1672 = vmatpush1.msra.mxu0 %v965
    %1673 = vmatprep.subr.mxu0 0.0
    %1674 = vmatpush1.msra.mxu0 %v970
    %1675 = vmatprep.subr.mxu0 0.0
    %1676 = vmatpush1.msra.mxu0 %v975
    %1677 = vmatprep.subr.mxu0 0.0
    %1678 = vmatpush1.msra.mxu0 %v980
    %1679 = vmatprep.subr.mxu0 0.0
    %1680 = vmatpush1.msra.mxu0 %v985
    %1681 = vmatprep.subr.mxu0 0.0
    %1682 = vmatpush1.msra.mxu0 %v990
    %1683 = vmatprep.subr.mxu0 0.0
    %1684 = vmatpush1.msra.mxu0 %v995
    %1685 = vmatprep.subr.mxu0 0.0
    %1686 = vmatpush1.msra.mxu0 %v1000
    %1687 = vmatprep.subr.mxu0 0.0
    %1688 = vmatpush1.msra.mxu0 %v1005
    %1689 = vmatprep.subr.mxu0 0.0
    %1690 = vmatpush1.msra.mxu0 %v1010
    %1691 = vmatprep.subr.mxu0 0.0
    %1692 = vmatpush1.msra.mxu0 %v1015
    %1693 = vmatprep.subr.mxu0 0.0
    %1694 = vmatpush1.msra.mxu0 %v1020
    %1695 = vmatprep.subr.mxu0 0.0
    %1696 = vmatpush1.msra.mxu0 %v1025
    %1697 = vmatprep.subr.mxu0 0.0
    %1698 = vmatpush1.msra.mxu0 0.0
    %1699 = vmatprep.subr.mxu0 0.0
    %1700 = vmatpush1.msra.mxu0 0.0
    %1701 = vmatprep.subr.mxu0 0.0
    %1702 = vmatpush1.msra.mxu0 0.0
    %1703 = vmatprep.subr.mxu0 0.0
    %1704 = vmatpush1.msra.mxu0 0.0
    %1705 = vmatprep.subr.mxu0 0.0
    %1706 = vmatpush1.msra.mxu0 0.0
    %1707 = vmatprep.subr.mxu0 0.0
    %1708 = vmatpush1.msra.mxu0 0.0
    %1709 = vmatprep.subr.mxu0 0.0
    %1710 = vmatpush1.msra.mxu0 0.0
    %1711 = vmatprep.subr.mxu0 0.0
    %1712 = vmatpush1.msra.mxu0 0.0
    %1713 = vmatprep.subr.mxu0 0.0
    %1714 = vmatpush1.msra.mxu0 0.0
    %1715 = vmatprep.subr.mxu0 0.0
    %1716 = vmatpush1.msra.mxu0 0.0
    %1717 = vmatprep.subr.mxu0 0.0
    %1718 = vmatpush1.msra.mxu0 0.0
    %1719 = vmatprep.subr.mxu0 0.0
    %1720 = vmatpush1.msra.mxu0 0.0
    %1721 = vmatprep.subr.mxu0 0.0
    %1722 = vmatpush1.msra.mxu0 0.0
    %1723 = vmatprep.subr.mxu0 0.0
    %1724 = vmatpush1.msra.mxu0 0.0
    %1725 = vmatprep.subr.mxu0 0.0
    %1726 = vmatpush1.msra.mxu0 0.0
    %1727 = vmatprep.subr.mxu0 0.0
    %1728 = vmatpush1.msra.mxu0 0.0
    %1729 = vmatprep.mubr.f32.mxu0 0.0
    %1730 = vmatmul.mubr.f32.gmra.mrb[0].mxu0 %v620
    %v1731 = vpop.f32.mrb[0].mxu0
    %v1732 = vadd.f32 %v1657, %v1731
    %v1733 = vpop.f32.mrb[0].mxu0
    %1734 = vmatprep.mubr.f32.mxu0 0.0
    %1735 = vmatmul.mubr.f32.gmra.mrb[0].mxu0 %v625
    %v1736 = vpop.f32.mrb[0].mxu0
    %v1737 = vadd.f32 %v1662, %v1736
    %v1738 = vpop.f32.mrb[0].mxu0
    %1739 = vdwg.mxu0
    %v1740 = vtanh.pop %v1274
    %v1741 = vtanh.pop %v1276
    %v1742 = vtanh.pop %v1505
    %v1743 = vtanh.pop %v1507
    %v1744 = vtanh.pop %v1732
    %v1745 = vtanh.pop %v1280
    %v1746 = vtanh.pop %v1282
    %v1747 = vtanh.pop %v1511
    %v1748 = vtanh.pop %v1513
    %v1749 = vtanh.pop %v1737
    %v1750 = vld [vmem:[#allocation14] sm:$0xff]
    %v1751 = vld [vmem:[#allocation14 + $0x8] sm:$0xff]
    %v1752 = vld [vmem:[#allocation14 + $0x10] sm:$0xff]
    %v1753 = vld [vmem:[#allocation14 + $0x18] sm:$0xff]
    %v1754 = vld [vmem:[#allocation14 + $0x20] sm:$0xff]
    %v1755 = vld [vmem:[#allocation14 + $0x28] sm:$0xff]
    %v1756 = vld [vmem:[#allocation14 + $0x30] sm:$0xff]
    %v1757 = vld [vmem:[#allocation14 + $0x38] sm:$0xff]
    %v1758 = vld [vmem:[#allocation14 + $0x40] sm:$0xff]
    %v1759 = vld [vmem:[#allocation14 + $0x48] sm:$0xff]
    %v1760 = vld [vmem:[#allocation14 + $0x50] sm:$0xff]
    %v1761 = vld [vmem:[#allocation14 + $0x58] sm:$0xff]
    %v1762 = vld [vmem:[#allocation14 + $0x60] sm:$0xff]
    %v1763 = vld [vmem:[#allocation14 + $0x68] sm:$0xff]
    %v1764 = vld [vmem:[#allocation14 + $0x70] sm:$0xff]
    %v1765 = vld [vmem:[#allocation14 + $0x78] sm:$0xff]
    %v1766 = vld [vmem:[#allocation14 + $0x80] sm:$0xff]
    %v1767 = vld [vmem:[#allocation14 + $0x88] sm:$0xff]
    %v1768 = vld [vmem:[#allocation14 + $0x90] sm:$0xff]
    %v1769 = vld [vmem:[#allocation14 + $0x98] sm:$0xff]
    %v1770 = vld [vmem:[#allocation14 + $0xa0] sm:$0xff]
    %v1771 = vld [vmem:[#allocation14 + $0xa8] sm:$0xff]
    %v1772 = vld [vmem:[#allocation14 + $0xb0] sm:$0xff]
    %v1773 = vld [vmem:[#allocation14 + $0xb8] sm:$0xff]
    %v1774 = vld [vmem:[#allocation14 + $0xc0] sm:$0xff]
    %v1775 = vld [vmem:[#allocation14 + $0xc8] sm:$0xff]
    %v1776 = vld [vmem:[#allocation14 + $0xd0] sm:$0xff]
    %v1777 = vld [vmem:[#allocation14 + $0xd8] sm:$0xff]
    %v1778 = vld [vmem:[#allocation14 + $0xe0] sm:$0xff]
    %v1779 = vld [vmem:[#allocation14 + $0xe8] sm:$0xff]
    %v1780 = vld [vmem:[#allocation14 + $0xf0] sm:$0xff]
    %v1781 = vld [vmem:[#allocation14 + $0xf8] sm:$0xff]
    %v1782 = vld [vmem:[#allocation14 + $0x100] sm:$0xff]
    %v1783 = vld [vmem:[#allocation14 + $0x108] sm:$0xff]
    %v1784 = vld [vmem:[#allocation14 + $0x110] sm:$0xff]
    %v1785 = vld [vmem:[#allocation14 + $0x118] sm:$0xff]
    %v1786 = vld [vmem:[#allocation14 + $0x120] sm:$0xff]
    %v1787 = vld [vmem:[#allocation14 + $0x128] sm:$0xff]
    %v1788 = vld [vmem:[#allocation14 + $0x130] sm:$0xff]
    %v1789 = vld [vmem:[#allocation14 + $0x138] sm:$0xff]
    %v1790 = vld [vmem:[#allocation14 + $0x140] sm:$0xff]
    %v1791 = vld [vmem:[#allocation14 + $0x148] sm:$0xff]
    %v1792 = vld [vmem:[#allocation14 + $0x150] sm:$0xff]
    %v1793 = vld [vmem:[#allocation14 + $0x158] sm:$0xff]
    %v1794 = vld [vmem:[#allocation14 + $0x160] sm:$0xff]
    %v1795 = vld [vmem:[#allocation14 + $0x168] sm:$0xff]
    %v1796 = vld [vmem:[#allocation14 + $0x170] sm:$0xff]
    %v1797 = vld [vmem:[#allocation14 + $0x178] sm:$0xff]
    %v1798 = vld [vmem:[#allocation14 + $0x180] sm:$0xff]
    %v1799 = vld [vmem:[#allocation14 + $0x188] sm:$0xff]
    %v1800 = vld [vmem:[#allocation14 + $0x190] sm:$0xff]
    %v1801 = vld [vmem:[#allocation14 + $0x198] sm:$0xff]
    %v1802 = vld [vmem:[#allocation14 + $0x1a0] sm:$0xff]
    %v1803 = vld [vmem:[#allocation14 + $0x1a8] sm:$0xff]
    %v1804 = vld [vmem:[#allocation14 + $0x1b0] sm:$0xff]
    %v1805 = vld [vmem:[#allocation14 + $0x1b8] sm:$0xff]
    %v1806 = vld [vmem:[#allocation14 + $0x1c0] sm:$0xff]
    %v1807 = vld [vmem:[#allocation14 + $0x1c8] sm:$0xff]
    %v1808 = vld [vmem:[#allocation14 + $0x1d0] sm:$0xff]
    %v1809 = vld [vmem:[#allocation14 + $0x1d8] sm:$0xff]
    %v1810 = vld [vmem:[#allocation14 + $0x1e0] sm:$0xff]
    %v1811 = vld [vmem:[#allocation14 + $0x1e8] sm:$0xff]
    %v1812 = vld [vmem:[#allocation14 + $0x1f0] sm:$0xff]
    %v1813 = vld [vmem:[#allocation14 + $0x1f8] sm:$0xff]
    %v1814 = vld [vmem:[#allocation14 + $0x200] sm:$0xff]
    %v1815 = vld [vmem:[#allocation14 + $0x208] sm:$0xff]
    %v1816 = vld [vmem:[#allocation14 + $0x210] sm:$0xff]
    %v1817 = vld [vmem:[#allocation14 + $0x218] sm:$0xff]
    %v1818 = vld [vmem:[#allocation14 + $0x220] sm:$0xff]
    %v1819 = vld [vmem:[#allocation14 + $0x228] sm:$0xff]
    %v1820 = vld [vmem:[#allocation14 + $0x230] sm:$0xff]
    %v1821 = vld [vmem:[#allocation14 + $0x238] sm:$0xff]
    %v1822 = vld [vmem:[#allocation14 + $0x240] sm:$0xff]
    %v1823 = vld [vmem:[#allocation14 + $0x248] sm:$0xff]
    %v1824 = vld [vmem:[#allocation14 + $0x250] sm:$0xff]
    %v1825 = vld [vmem:[#allocation14 + $0x258] sm:$0xff]
    %v1826 = vld [vmem:[#allocation14 + $0x260] sm:$0xff]
    %v1827 = vld [vmem:[#allocation14 + $0x268] sm:$0xff]
    %v1828 = vld [vmem:[#allocation14 + $0x270] sm:$0xff]
    %v1829 = vld [vmem:[#allocation14 + $0x278] sm:$0xff]
    %v1830 = vld [vmem:[#allocation16] sm:$0x1]
    %v1832 = vlaneseq
    %v1833 = vshrl.u32 %v1832, 7
    %v1834 = vsub.s32 0, %v1833
    %v1835 = vrot.slane %v1830, %v1834
    %1837 = vmatprep.subr.mxu0 0.0
    %1838 = vmatpush1.msra.mxu0 %v1750
    %1839 = vmatprep.subr.mxu0 0.0
    %1840 = vmatpush1.msra.mxu0 %v1751
    %1841 = vmatprep.subr.mxu0 0.0
    %1842 = vmatpush1.msra.mxu0 %v1752
    %1843 = vmatprep.subr.mxu0 0.0
    %1844 = vmatpush1.msra.mxu0 %v1753
    %1845 = vmatprep.subr.mxu0 0.0
    %1846 = vmatpush1.msra.mxu0 %v1754
    %1847 = vmatprep.subr.mxu0 0.0
    %1848 = vmatpush1.msra.mxu0 %v1755
    %1849 = vmatprep.subr.mxu0 0.0
    %1850 = vmatpush1.msra.mxu0 %v1756
    %1851 = vmatprep.subr.mxu0 0.0
    %1852 = vmatpush1.msra.mxu0 %v1757
    %1853 = vmatprep.subr.mxu0 0.0
    %1854 = vmatpush1.msra.mxu0 %v1758
    %1855 = vmatprep.subr.mxu0 0.0
    %1856 = vmatpush1.msra.mxu0 %v1759
    %1857 = vmatprep.subr.mxu0 0.0
    %1858 = vmatpush1.msra.mxu0 %v1760
    %1859 = vmatprep.subr.mxu0 0.0
    %1860 = vmatpush1.msra.mxu0 %v1761
    %1861 = vmatprep.subr.mxu0 0.0
    %1862 = vmatpush1.msra.mxu0 %v1762
    %1863 = vmatprep.subr.mxu0 0.0
    %1864 = vmatpush1.msra.mxu0 %v1763
    %1865 = vmatprep.subr.mxu0 0.0
    %1866 = vmatpush1.msra.mxu0 %v1764
    %1867 = vmatprep.subr.mxu0 0.0
    %1868 = vmatpush1.msra.mxu0 %v1765
    %1869 = vmatprep.subr.mxu0 0.0
    %1870 = vmatpush1.msra.mxu0 %v1766
    %1871 = vmatprep.subr.mxu0 0.0
    %1872 = vmatpush1.msra.mxu0 %v1767
    %1873 = vmatprep.subr.mxu0 0.0
    %1874 = vmatpush1.msra.mxu0 %v1768
    %1875 = vmatprep.subr.mxu0 0.0
    %1876 = vmatpush1.msra.mxu0 %v1769
    %1877 = vmatprep.subr.mxu0 0.0
    %1878 = vmatpush1.msra.mxu0 %v1770
    %1879 = vmatprep.subr.mxu0 0.0
    %1880 = vmatpush1.msra.mxu0 %v1771
    %1881 = vmatprep.subr.mxu0 0.0
    %1882 = vmatpush1.msra.mxu0 %v1772
    %1883 = vmatprep.subr.mxu0 0.0
    %1884 = vmatpush1.msra.mxu0 %v1773
    %1885 = vmatprep.subr.mxu0 0.0
    %1886 = vmatpush1.msra.mxu0 %v1774
    %1887 = vmatprep.subr.mxu0 0.0
    %1888 = vmatpush1.msra.mxu0 %v1775
    %1889 = vmatprep.subr.mxu0 0.0
    %1890 = vmatpush1.msra.mxu0 %v1776
    %1891 = vmatprep.subr.mxu0 0.0
    %1892 = vmatpush1.msra.mxu0 %v1777
    %1893 = vmatprep.subr.mxu0 0.0
    %1894 = vmatpush1.msra.mxu0 %v1778
    %1895 = vmatprep.subr.mxu0 0.0
    %1896 = vmatpush1.msra.mxu0 %v1779
    %1897 = vmatprep.subr.mxu0 0.0
    %1898 = vmatpush1.msra.mxu0 %v1780
    %1899 = vmatprep.subr.mxu0 0.0
    %1900 = vmatpush1.msra.mxu0 %v1781
    %1901 = vmatprep.mubr.f32.mxu0 %v1741
    %1902 = vmatmul.mubr.f32.gmra.mrb[0].mxu0 %v1740
    %v1903 = vpop.f32.mrb[0].mxu0
    %v1904 = vadd.f32 %v1835, %v1903
    %v1905 = vpop.f32.mrb[0].mxu0
    %1906 = vmatprep.mubr.f32.mxu0 %v1746
    %1907 = vmatmul.mubr.f32.gmra.mrb[0].mxu0 %v1745
    %v1908 = vpop.f32.mrb[0].mxu0
    %v1909 = vadd.f32 %v1835, %v1908
    %v1910 = vpop.f32.mrb[0].mxu0
    %1911 = vdwg.mxu0
    %1912 = vmatprep.subr.mxu0 0.0
    %1913 = vmatpush1.msra.mxu0 %v1782
    %1914 = vmatprep.subr.mxu0 0.0
    %1915 = vmatpush1.msra.mxu0 %v1783
    %1916 = vmatprep.subr.mxu0 0.0
    %1917 = vmatpush1.msra.mxu0 %v1784
    %1918 = vmatprep.subr.mxu0 0.0
    %1919 = vmatpush1.msra.mxu0 %v1785
    %1920 = vmatprep.subr.mxu0 0.0
    %1921 = vmatpush1.msra.mxu0 %v1786
    %1922 = vmatprep.subr.mxu0 0.0
    %1923 = vmatpush1.msra.mxu0 %v1787
    %1924 = vmatprep.subr.mxu0 0.0
    %1925 = vmatpush1.msra.mxu0 %v1788
    %1926 = vmatprep.subr.mxu0 0.0
    %1927 = vmatpush1.msra.mxu0 %v1789
    %1928 = vmatprep.subr.mxu0 0.0
    %1929 = vmatpush1.msra.mxu0 %v1790
    %1930 = vmatprep.subr.mxu0 0.0
    %1931 = vmatpush1.msra.mxu0 %v1791
    %1932 = vmatprep.subr.mxu0 0.0
    %1933 = vmatpush1.msra.mxu0 %v1792
    %1934 = vmatprep.subr.mxu0 0.0
    %1935 = vmatpush1.msra.mxu0 %v1793
    %1936 = vmatprep.subr.mxu0 0.0
    %1937 = vmatpush1.msra.mxu0 %v1794
    %1938 = vmatprep.subr.mxu0 0.0
    %1939 = vmatpush1.msra.mxu0 %v1795
    %1940 = vmatprep.subr.mxu0 0.0
    %1941 = vmatpush1.msra.mxu0 %v1796
    %1942 = vmatprep.subr.mxu0 0.0
    %1943 = vmatpush1.msra.mxu0 %v1797
    %1944 = vmatprep.subr.mxu0 0.0
    %1945 = vmatpush1.msra.mxu0 %v1798
    %1946 = vmatprep.subr.mxu0 0.0
    %1947 = vmatpush1.msra.mxu0 %v1799
    %1948 = vmatprep.subr.mxu0 0.0
    %1949 = vmatpush1.msra.mxu0 %v1800
    %1950 = vmatprep.subr.mxu0 0.0
    %1951 = vmatpush1.msra.mxu0 %v1801
    %1952 = vmatprep.subr.mxu0 0.0
    %1953 = vmatpush1.msra.mxu0 %v1802
    %1954 = vmatprep.subr.mxu0 0.0
    %1955 = vmatpush1.msra.mxu0 %v1803
    %1956 = vmatprep.subr.mxu0 0.0
    %1957 = vmatpush1.msra.mxu0 %v1804
    %1958 = vmatprep.subr.mxu0 0.0
    %1959 = vmatpush1.msra.mxu0 %v1805
    %1960 = vmatprep.subr.mxu0 0.0
    %1961 = vmatpush1.msra.mxu0 %v1806
    %1962 = vmatprep.subr.mxu0 0.0
    %1963 = vmatpush1.msra.mxu0 %v1807
    %1964 = vmatprep.subr.mxu0 0.0
    %1965 = vmatpush1.msra.mxu0 %v1808
    %1966 = vmatprep.subr.mxu0 0.0
    %1967 = vmatpush1.msra.mxu0 %v1809
    %1968 = vmatprep.subr.mxu0 0.0
    %1969 = vmatpush1.msra.mxu0 %v1810
    %1970 = vmatprep.subr.mxu0 0.0
    %1971 = vmatpush1.msra.mxu0 %v1811
    %1972 = vmatprep.subr.mxu0 0.0
    %1973 = vmatpush1.msra.mxu0 %v1812
    %1974 = vmatprep.subr.mxu0 0.0
    %1975 = vmatpush1.msra.mxu0 %v1813
    %1976 = vmatprep.mubr.f32.mxu0 %v1743
    %1977 = vmatmul.mubr.f32.gmra.mrb[0].mxu0 %v1742
    %v1978 = vpop.f32.mrb[0].mxu0
    %v1979 = vadd.f32 %v1904, %v1978
    %v1980 = vpop.f32.mrb[0].mxu0
    %1981 = vmatprep.mubr.f32.mxu0 %v1748
    %1982 = vmatmul.mubr.f32.gmra.mrb[0].mxu0 %v1747
    %v1983 = vpop.f32.mrb[0].mxu0
    %v1984 = vadd.f32 %v1909, %v1983
    %v1985 = vpop.f32.mrb[0].mxu0
    %1986 = vdwg.mxu0
    %1987 = vmatprep.subr.mxu0 0.0
    %1988 = vmatpush1.msra.mxu0 %v1814
    %1989 = vmatprep.subr.mxu0 0.0
    %1990 = vmatpush1.msra.mxu0 %v1815
    %1991 = vmatprep.subr.mxu0 0.0
    %1992 = vmatpush1.msra.mxu0 %v1816
    %1993 = vmatprep.subr.mxu0 0.0
    %1994 = vmatpush1.msra.mxu0 %v1817
    %1995 = vmatprep.subr.mxu0 0.0
    %1996 = vmatpush1.msra.mxu0 %v1818
    %1997 = vmatprep.subr.mxu0 0.0
    %1998 = vmatpush1.msra.mxu0 %v1819
    %1999 = vmatprep.subr.mxu0 0.0
    %2000 = vmatpush1.msra.mxu0 %v1820
    %2001 = vmatprep.subr.mxu0 0.0
    %2002 = vmatpush1.msra.mxu0 %v1821
    %2003 = vmatprep.subr.mxu0 0.0
    %2004 = vmatpush1.msra.mxu0 %v1822
    %2005 = vmatprep.subr.mxu0 0.0
    %2006 = vmatpush1.msra.mxu0 %v1823
    %2007 = vmatprep.subr.mxu0 0.0
    %2008 = vmatpush1.msra.mxu0 %v1824
    %2009 = vmatprep.subr.mxu0 0.0
    %2010 = vmatpush1.msra.mxu0 %v1825
    %2011 = vmatprep.subr.mxu0 0.0
    %2012 = vmatpush1.msra.mxu0 %v1826
    %2013 = vmatprep.subr.mxu0 0.0
    %2014 = vmatpush1.msra.mxu0 %v1827
    %2015 = vmatprep.subr.mxu0 0.0
    %2016 = vmatpush1.msra.mxu0 %v1828
    %2017 = vmatprep.subr.mxu0 0.0
    %2018 = vmatpush1.msra.mxu0 %v1829
    %2019 = vmatprep.subr.mxu0 0.0
    %2020 = vmatpush1.msra.mxu0 0.0
    %2021 = vmatprep.subr.mxu0 0.0
    %2022 = vmatpush1.msra.mxu0 0.0
    %2023 = vmatprep.subr.mxu0 0.0
    %2024 = vmatpush1.msra.mxu0 0.0
    %2025 = vmatprep.subr.mxu0 0.0
    %2026 = vmatpush1.msra.mxu0 0.0
    %2027 = vmatprep.subr.mxu0 0.0
    %2028 = vmatpush1.msra.mxu0 0.0
    %2029 = vmatprep.subr.mxu0 0.0
    %2030 = vmatpush1.msra.mxu0 0.0
    %2031 = vmatprep.subr.mxu0 0.0
    %2032 = vmatpush1.msra.mxu0 0.0
    %2033 = vmatprep.subr.mxu0 0.0
    %2034 = vmatpush1.msra.mxu0 0.0
    %2035 = vmatprep.subr.mxu0 0.0
    %2036 = vmatpush1.msra.mxu0 0.0
    %2037 = vmatprep.subr.mxu0 0.0
    %2038 = vmatpush1.msra.mxu0 0.0
    %2039 = vmatprep.subr.mxu0 0.0
    %2040 = vmatpush1.msra.mxu0 0.0
    %2041 = vmatprep.subr.mxu0 0.0
    %2042 = vmatpush1.msra.mxu0 0.0
    %2043 = vmatprep.subr.mxu0 0.0
    %2044 = vmatpush1.msra.mxu0 0.0
    %2045 = vmatprep.subr.mxu0 0.0
    %2046 = vmatpush1.msra.mxu0 0.0
    %2047 = vmatprep.subr.mxu0 0.0
    %2048 = vmatpush1.msra.mxu0 0.0
    %2049 = vmatprep.subr.mxu0 0.0
    %2050 = vmatpush1.msra.mxu0 0.0
    %2051 = vmatprep.mubr.f32.mxu0 0.0
    %2052 = vmatmul.mubr.f32.gmra.mrb[0].mxu0 %v1744
    %v2053 = vpop.f32.mrb[0].mxu0
    %v2054 = vadd.f32 %v1979, %v2053
    %v2055 = vpop.f32.mrb[0].mxu0
    %2056 = vmatprep.mubr.f32.mxu0 0.0
    %2057 = vmatmul.mubr.f32.gmra.mrb[0].mxu0 %v1749
    %v2058 = vpop.f32.mrb[0].mxu0
    %v2059 = vadd.f32 %v1984, %v2058
    %v2060 = vpop.f32.mrb[0].mxu0
    %2061 = vdwg.mxu0
    %v2062 = vtanh.pop %v2054
    %v2063 = vtanh.pop %v2059
    %v2064 = vld [vmem:[#allocation17] sm:$0xff]
    %v2065 = vld [vmem:[#allocation17 + $0x8] sm:$0xff]
    %v2066 = vld [vmem:[#allocation17 + $0x10] sm:$0xff]
    %v2067 = vld [vmem:[#allocation17 + $0x18] sm:$0xff]
    %v2068 = vld [vmem:[#allocation17 + $0x20] sm:$0xff]
    %v2069 = vld [vmem:[#allocation17 + $0x28] sm:$0xff]
    %v2070 = vld [vmem:[#allocation17 + $0x30] sm:$0xff]
    %v2071 = vld [vmem:[#allocation17 + $0x38] sm:$0xff]
    %v2072 = vld [vmem:[#allocation17 + $0x40] sm:$0xff]
    %v2073 = vld [vmem:[#allocation17 + $0x48] sm:$0xff]
    %v2074 = vld [vmem:[#allocation17 + $0x50] sm:$0xff]
    %v2075 = vld [vmem:[#allocation17 + $0x58] sm:$0xff]
    %v2076 = vld [vmem:[#allocation17 + $0x60] sm:$0xff]
    %v2077 = vld [vmem:[#allocation17 + $0x68] sm:$0xff]
    %v2078 = vld [vmem:[#allocation17 + $0x70] sm:$0xff]
    %v2079 = vld [vmem:[#allocation17 + $0x78] sm:$0xff]
    %v2080 = vld [vmem:[#allocation19] sm:$0x1]
    %v2082 = vlaneseq
    %v2083 = vshrl.u32 %v2082, 7
    %v2084 = vsub.s32 0, %v2083
    %v2085 = vrot.slane %v2080, %v2084
    %2087 = vmatprep.subr.mxu0 0.0
    %2088 = vmatpush1.msra.mxu0 %v2064
    %2089 = vmatprep.subr.mxu0 0.0
    %2090 = vmatpush1.msra.mxu0 %v2065
    %2091 = vmatprep.subr.mxu0 0.0
    %2092 = vmatpush1.msra.mxu0 %v2066
    %2093 = vmatprep.subr.mxu0 0.0
    %2094 = vmatpush1.msra.mxu0 %v2067
    %2095 = vmatprep.subr.mxu0 0.0
    %2096 = vmatpush1.msra.mxu0 %v2068
    %2097 = vmatprep.subr.mxu0 0.0
    %2098 = vmatpush1.msra.mxu0 %v2069
    %2099 = vmatprep.subr.mxu0 0.0
    %2100 = vmatpush1.msra.mxu0 %v2070
    %2101 = vmatprep.subr.mxu0 0.0
    %2102 = vmatpush1.msra.mxu0 %v2071
    %2103 = vmatprep.subr.mxu0 0.0
    %2104 = vmatpush1.msra.mxu0 %v2072
    %2105 = vmatprep.subr.mxu0 0.0
    %2106 = vmatpush1.msra.mxu0 %v2073
    %2107 = vmatprep.subr.mxu0 0.0
    %2108 = vmatpush1.msra.mxu0 %v2074
    %2109 = vmatprep.subr.mxu0 0.0
    %2110 = vmatpush1.msra.mxu0 %v2075
    %2111 = vmatprep.subr.mxu0 0.0
    %2112 = vmatpush1.msra.mxu0 %v2076
    %2113 = vmatprep.subr.mxu0 0.0
    %2114 = vmatpush1.msra.mxu0 %v2077
    %2115 = vmatprep.subr.mxu0 0.0
    %2116 = vmatpush1.msra.mxu0 %v2078
    %2117 = vmatprep.subr.mxu0 0.0
    %2118 = vmatpush1.msra.mxu0 %v2079
    %2119 = vmatprep.subr.mxu0 0.0
    %2120 = vmatpush1.msra.mxu0 0.0
    %2121 = vmatprep.subr.mxu0 0.0
    %2122 = vmatpush1.msra.mxu0 0.0
    %2123 = vmatprep.subr.mxu0 0.0
    %2124 = vmatpush1.msra.mxu0 0.0
    %2125 = vmatprep.subr.mxu0 0.0
    %2126 = vmatpush1.msra.mxu0 0.0
    %2127 = vmatprep.subr.mxu0 0.0
    %2128 = vmatpush1.msra.mxu0 0.0
    %2129 = vmatprep.subr.mxu0 0.0
    %2130 = vmatpush1.msra.mxu0 0.0
    %2131 = vmatprep.subr.mxu0 0.0
    %2132 = vmatpush1.msra.mxu0 0.0
    %2133 = vmatprep.subr.mxu0 0.0
    %2134 = vmatpush1.msra.mxu0 0.0
    %2135 = vmatprep.subr.mxu0 0.0
    %2136 = vmatpush1.msra.mxu0 0.0
    %2137 = vmatprep.subr.mxu0 0.0
    %2138 = vmatpush1.msra.mxu0 0.0
    %2139 = vmatprep.subr.mxu0 0.0
    %2140 = vmatpush1.msra.mxu0 0.0
    %2141 = vmatprep.subr.mxu0 0.0
    %2142 = vmatpush1.msra.mxu0 0.0
    %2143 = vmatprep.subr.mxu0 0.0
    %2144 = vmatpush1.msra.mxu0 0.0
    %2145 = vmatprep.subr.mxu0 0.0
    %2146 = vmatpush1.msra.mxu0 0.0
    %2147 = vmatprep.subr.mxu0 0.0
    %2148 = vmatpush1.msra.mxu0 0.0
    %2149 = vmatprep.subr.mxu0 0.0
    %2150 = vmatpush1.msra.mxu0 0.0
    %2151 = vmatprep.mubr.f32.mxu0 0.0
    %2152 = vmatmul.mubr.f32.gmra.mrb[0].mxu0 %v2062
    %v2153 = vpop.f32.mrb[0].mxu0
    %v2154 = vadd.f32 %v2085, %v2153
    %v2155 = vpop.f32.mrb[0].mxu0
    %2156 = vmatprep.mubr.f32.mxu0 0.0
    %2157 = vmatmul.mubr.f32.gmra.mrb[0].mxu0 %v2063
    %v2158 = vpop.f32.mrb[0].mxu0
    %v2159 = vadd.f32 %v2085, %v2158
    %v2160 = vpop.f32.mrb[0].mxu0
    %2161 = vdwg.mxu0
    %2162 = vst [vmem:[#allocation20] sm:$0xff] %v2154
    %2163 = vst [vmem:[#allocation20 + $0x8] sm:$0xff] %v2159
    // Predicated region
    $region90: #{tpu_custom_call.1} parent=1 // pred_check
      _
    $region91: #{tpu_custom_call.1} parent=1 // pred_check_branch
      %2165 = sbr.rel (0) target = $region93
    $region92: #{tpu_custom_call.1} parent=1 // pred_region
      %s2167 = ssub.s32 256, 256
      %2168 = vsyncadd [#allocation4], %s2167
      %s2169 = sshll.u32 [#allocation20], 4
      %s2170 = int_to_ptr.vmem [resolvable:$true] %s2169
      %2175 = dma.vmem_to_hbm [thread:$0]  %s2170, 256, %s11, [#allocation4], 128, 128, 8
    $region93: #{tpu_custom_call.1} parent=1 // pred_fallthru
      _
    // Predicated region
    $region94: #{tpu_custom_call.1} parent=1 // pred_check
      _
    $region95: #{tpu_custom_call.1} parent=1 // pred_check_branch
      %2177 = sbr.rel (0) target = $region97
    $region96: #{tpu_custom_call.1} parent=1 // pred_region
      %2178 = dma.done [#allocation4], 256
    $region97: #{tpu_custom_call.1} parent=1 // pred_fallthru
      _
    %2179 = vsyncpa [#allocation3], 1
    %2180 = vsyncpa [#allocation6], 1
    %2181 = vsyncpa [#allocation9], 1
    %2182 = vsyncpa [#allocation12], 1
    %2183 = vsyncpa [#allocation15], 1
    %2184 = vsyncpa [#allocation18], 1
    %2185 = vsyncpa [#allocation4], 1

</llo_original>
